<compile_context>
chip_gen: v7x
topology: tpu7x:2x2x1
jax: 0.10.0
libtpu: 0.0.40
codegen_flags: <defaults>
</compile_context>

<pallas_src>
import jax
import jax.numpy as jnp
from jax import lax
from jax.experimental import pallas as pl
from jax.experimental.pallas import tpu as pltpu


LANE = 128    # TPU lane width (last dim)
SUBLANE = 8   # TPU sublane width (second-to-last dim, f32)


def _round_up(x, m):
    return (x + m - 1) // m * m


# ----------------------------------------------------------------------------
# Pallas kernels
# ----------------------------------------------------------------------------
def _make_rnn_stack_kernel(num_layers):
    """Kernel running all `num_layers` Elman-RNN layers over all timesteps."""
    L = num_layers

    def kernel(*refs):
        x_ref = refs[0]                          # (T, Bp, Ep)  f32 input slab
        wih_refs = refs[1:1 + L]                 # (in_p, Hp)   bf16 per layer
        whh_refs = refs[1 + L:1 + 2 * L]         # (Hp, Hp)     bf16 per layer
        b_refs = refs[1 + 2 * L:1 + 3 * L]       # (1, Hp)      f32  per layer
        out_ref = refs[1 + 3 * L]                # (T, Bp, Hp)  f32 last layer
        hid_ref = refs[2 + 3 * L]                # (L, Bp, Hp)  f32 final h's
        buf_ref = refs[3 + 3 * L]                # (T, Bp, Hp)  f32 scratch

        T, Bp, _ = x_ref.shape
        Hp = out_ref.shape[-1]

        src = x_ref
        for l in range(L):
            # ping-pong between out_ref / buf_ref so the LAST layer always
            # lands in out_ref (never aliases its own input).
            dst = out_ref if ((L - 1 - l) % 2 == 0) else buf_ref

            # ---- hoisted input projection: one big MXU GEMM ---------------
            in_p = src.shape[-1]
            x_flat = src[...].reshape(T * Bp, in_p).astype(jnp.bfloat16)
            pre = jnp.dot(x_flat, wih_refs[l][...],
                          preferred_element_type=jnp.float32)
            pre = pre + b_refs[l][...]           # combined bias (b_ih + b_hh)
            dst[...] = pre.reshape(T, Bp, Hp)    # stage PRE in the dst buffer

            whh = whh_refs[l][...]               # resident (Hp, Hp) bf16

            # ---- sequential recurrence: (Bp,Hp)@(Hp,Hp) + tanh per step ---
            def step(t, h, dst=dst, whh=whh):
                h_new = jnp.tanh(
                    jnp.dot(h.astype(jnp.bfloat16), whh,
                            preferred_element_type=jnp.float32)
                    + dst[t])
                dst[t] = h_new
                return h_new

            h = jnp.zeros((Bp, Hp), jnp.float32)
            if T <= 64:
                for t in range(T):               # static unroll: static addrs
                    h = step(t, h)
            else:                                # long sequences: rolled loop
                h = lax.fori_loop(0, T, step, h)
            hid_ref[l] = h
            src = dst

    return kernel


def linear_kernel(x_ref, w_ref, b_ref, o_ref):
    """(Np, Hp) @ (Hp, tv) + (1, tv) -> (Np, tv) vocab tile."""
    o_ref[...] = (
        jnp.dot(x_ref[...], w_ref[...], preferred_element_type=jnp.float32)
        + b_ref[...]
    )


# ----------------------------------------------------------------------------
# Wrappers
# ----------------------------------------------------------------------------
def rnn_stack(x_tm, wihs, whhs, biases):
    """x_tm: (T, Bp, Ep) f32 time-major padded input.

    Returns (out (T, Bp, Hp) f32, hid (L, Bp, Hp) f32).
    """
    T, Bp, _ = x_tm.shape
    L = len(wihs)
    Hp = whhs[0].shape[1]
    # TODO(synk): for very long sequences the whole (T,Bp,Hp) slab may exceed
    # VMEM; a chunked-over-T variant with a carried hidden state would be
    # needed there.
    return pl.pallas_call(
        _make_rnn_stack_kernel(L),
        out_shape=(jax.ShapeDtypeStruct((T, Bp, Hp), jnp.float32),
                   jax.ShapeDtypeStruct((L, Bp, Hp), jnp.float32)),
        scratch_shapes=[pltpu.VMEM((T, Bp, Hp), jnp.float32)],
    )(x_tm, *wihs, *whhs, *biases)


def vocab_projection(x_bf16, w_t_bf16, bias):
    """x: (Np, Hp) bf16, w_t: (Hp, Vp) bf16, bias: (1, Vp) f32 -> (Np, Vp) f32."""
    Np, Hp = x_bf16.shape
    Vp = w_t_bf16.shape[1]
    tv = min(Vp, 512)                       # lane tile, multiple of 128
    assert Vp % tv == 0
    cost = pl.CostEstimate(
        flops=2 * Np * Hp * Vp,
        transcendentals=0,
        bytes_accessed=2 * Np * Hp + 2 * Hp * Vp + 4 * Vp + 4 * Np * Vp,
    )
    return pl.pallas_call(
        linear_kernel,
        out_shape=jax.ShapeDtypeStruct((Np, Vp), jnp.float32),
        grid_spec=pltpu.PrefetchScalarGridSpec(
            num_scalar_prefetch=0,
            grid=(Vp // tv,),
            in_specs=[
                pl.BlockSpec((Np, Hp), lambda j: (0, 0)),   # activations resident
                pl.BlockSpec((Hp, tv), lambda j: (0, j)),
                pl.BlockSpec((1, tv), lambda j: (0, j)),
            ],
            out_specs=pl.BlockSpec((Np, tv), lambda j: (0, j)),
        ),
        compiler_params=pltpu.CompilerParams(
            dimension_semantics=("parallel",),   # vocab tiles -> v7x dual-TC
            vmem_limit_bytes=32 * 1024 * 1024,
        ),
        cost_estimate=cost,
    )(x_bf16, w_t_bf16, bias)


@jax.jit
def rnnlm_forward(x_ids, params):
    """Reproduces RNNLM.forward(x, hidden=None).

    x_ids : (B, T) int32 token ids
    Returns (out, hidden): out (B*T, vocab) f32, hidden (num_layers, B, H) f32.
    """
    emb = params["embedding"]                     # (vocab, E)
    vocab, E = emb.shape
    B, T = x_ids.shape
    H = params["rnn_layers"][0]["w_hh_t"].shape[0]

    Ep = _round_up(E, LANE)
    Hp = _round_up(H, LANE)
    Bp = _round_up(B, SUBLANE)
    tv = min(_round_up(vocab, LANE), 512)
    Vp = _round_up(vocab, tv)

    # Embedding lookup, produced time-major directly (no activation transpose).
    # TODO(synk): the gather stays in plain JAX; a Pallas scalar-prefetch row
    # gather only pays off at much larger embed_dim / batch.
    emb_p = jnp.pad(emb, ((0, 0), (0, Ep - E)))
    x_tm = jnp.take(emb_p, x_ids.T, axis=0)                  # (T, B, Ep)
    x_tm = jnp.pad(x_tm, ((0, 0), (0, Bp - B), (0, 0)))      # (T, Bp, Ep)

    # Pad / stack per-layer weights (pre-transposed: (in, H) / (H, H)).
    wihs, whhs, biases = [], [], []
    in_p = Ep
    for lyr in params["rnn_layers"]:
        in_dim = lyr["w_ih_t"].shape[0]
        wihs.append(jnp.pad(lyr["w_ih_t"],
                            ((0, in_p - in_dim), (0, Hp - H))).astype(jnp.bfloat16))
        whhs.append(jnp.pad(lyr["w_hh_t"],
                            ((0, Hp - H), (0, Hp - H))).astype(jnp.bfloat16))
        biases.append(jnp.pad(lyr["bias"], ((0, 0), (0, Hp - H))))
        in_p = Hp

    out_tm, hid = rnn_stack(x_tm, wihs, whhs, biases)        # (T,Bp,Hp),(L,Bp,Hp)
    hidden = hid[:, :B, :H]                                  # (L, B, H)

    # Batch-first flatten for the vocab projection (only the small hidden slab
    # is permuted; lanes stay 128-dense).
    out_bf = jnp.transpose(out_tm[:, :B, :], (1, 0, 2)).reshape(B * T, Hp)
    N = B * T
    Np = _round_up(N, SUBLANE)
    out_bf = jnp.pad(out_bf, ((0, Np - N), (0, 0))).astype(jnp.bfloat16)

    w_lin = jnp.pad(params["w_lin_t"],
                    ((0, Hp - H), (0, Vp - vocab))).astype(jnp.bfloat16)
    b_lin = jnp.pad(params["b_lin"], ((0, 0), (0, Vp - vocab)))
    logits = vocab_projection(out_bf, w_lin, b_lin)          # (Np, Vp)
    return logits[:N, :vocab], hidden


# ----------------------------------------------------------------------------
# Deterministic parameter construction (mimics module __init__ shapes)
# ----------------------------------------------------------------------------
def make_params(key, vocab_size, embed_dim, dim_size, num_layers):
    keys = jax.random.split(key, 3 + 4 * num_layers)
    scale = 1.0 / jnp.sqrt(dim_size)

    embedding = jax.random.normal(keys[0], (vocab_size, embed_dim), jnp.float32)

    rnn_layers = []
    for l in range(num_layers):
        in_dim = embed_dim if l == 0 else dim_size
        k_ih, k_hh, k_bih, k_bhh = keys[3 + 4 * l: 3 + 4 * (l + 1)]
        # PyTorch stores weight_ih as (H, in_dim); we keep the transpose (in_dim, H).
        w_ih_t = jax.random.uniform(k_ih, (in_dim, dim_size), jnp.float32, -scale, scale)
        w_hh_t = jax.random.uniform(k_hh, (dim_size, dim_size), jnp.float32, -scale, scale)
        b_ih = jax.random.uniform(k_bih, (dim_size,), jnp.float32, -scale, scale)
        b_hh = jax.random.uniform(k_bhh, (dim_size,), jnp.float32, -scale, scale)
        rnn_layers.append(
            dict(w_ih_t=w_ih_t, w_hh_t=w_hh_t,
                 bias=(b_ih + b_hh).reshape(1, dim_size))
        )

    w_lin_t = jax.random.uniform(keys[1], (dim_size, vocab_size), jnp.float32, -scale, scale)
    b_lin = jax.random.uniform(keys[2], (1, vocab_size), jnp.float32, -scale, scale)

    return dict(embedding=embedding, rnn_layers=rnn_layers,
                w_lin_t=w_lin_t, b_lin=b_lin)


# Pure-JAX f32 reference for a sanity check
def rnnlm_reference(x_ids, params):
    ebd = jnp.take(params["embedding"], x_ids, axis=0)      # (B, T, E)
    B, T, _ = ebd.shape
    layer_in = ebd
    hiddens = []
    for lyr in params["rnn_layers"]:
        H = lyr["w_hh_t"].shape[0]
        h = jnp.zeros((B, H), jnp.float32)
        outs = []
        for t in range(T):
            h = jnp.tanh(layer_in[:, t, :] @ lyr["w_ih_t"]
                         + h @ lyr["w_hh_t"] + lyr["bias"])
            outs.append(h)
        layer_in = jnp.stack(outs, axis=1)                  # (B, T, H)
        hiddens.append(h)
    hidden = jnp.stack(hiddens, axis=0)
    out = layer_in.reshape(B * T, -1) @ params["w_lin_t"] + params["b_lin"]
    return out, hidden


if __name__ == "__main__":
    # Small shapes implied by the module: batch=2, seq=8, embed_dim=32,
    # dim_size(hidden)=32, num_layers=2, vocab_size=64.
    B, T = 2, 8
    vocab_size, embed_dim, dim_size, num_layers = 64, 32, 32, 2

    key = jax.random.PRNGKey(0)
    k_par, k_ids = jax.random.split(key)
    params = make_params(k_par, vocab_size, embed_dim, dim_size, num_layers)
    x_ids = jax.random.randint(k_ids, (B, T), 0, vocab_size, dtype=jnp.int32)

    out, hidden = rnnlm_forward(x_ids, params)
    out, hidden = jax.block_until_ready((out, hidden))

    assert out.shape == (B * T, vocab_size), out.shape
    assert hidden.shape == (num_layers, B, dim_size), hidden.shape

    out_ref, hidden_ref = rnnlm_reference(x_ids, params)
    assert jnp.allclose(out, out_ref, atol=2e-2, rtol=2e-2), (
        float(jnp.max(jnp.abs(out - out_ref))))
    assert jnp.allclose(hidden, hidden_ref, atol=2e-2, rtol=2e-2), (
        float(jnp.max(jnp.abs(hidden - hidden_ref))))

    print("KERNEL_OK")
</pallas_src>

<mosaic_0001>
module attributes {stable_mosaic.version = 11 : i64} {
  func.func @linear_kernel(%arg0: i32, %arg1: memref<16x128xbf16, #tpu.memory_space<vmem>>, %arg2: memref<128x128xbf16, #tpu.memory_space<vmem>>, %arg3: memref<1x128xf32, #tpu.memory_space<vmem>>, %arg4: memref<16x128xf32, #tpu.memory_space<vmem>>) attributes {dimension_semantics = [#tpu.dimension_semantics<parallel>], iteration_bounds = array<i64: 1>, scalar_prefetch = 0 : i64, scratch_operands = 0 : i64, tpu.core_type = #tpu.core_type<tc>, window_params = [{pipeline_mode = #tpu.pipeline_mode<synchronous>, transform_indices = @transform_0, window_bounds = array<i64: 16, 128>}, {transform_indices = @transform_1, window_bounds = array<i64: 128, 128>}, {transform_indices = @transform_2, window_bounds = array<i64: 1, 128>}, {transform_indices = @transform_3, window_bounds = array<i64: 16, 128>}]} {
    %c0 = arith.constant 0 : index
    %c0_0 = arith.constant 0 : index
    %0 = vector.load %arg1[%c0, %c0_0] : memref<16x128xbf16, #tpu.memory_space<vmem>>, vector<16x128xbf16>
    %c0_1 = arith.constant 0 : index
    %c0_2 = arith.constant 0 : index
    %1 = vector.load %arg2[%c0_1, %c0_2] : memref<128x128xbf16, #tpu.memory_space<vmem>>, vector<128x128xbf16>
    %cst = arith.constant dense<0.000000e+00> : vector<16x128xf32>
    %2 = tpu.matmul %0, %1, %cst {dimension_numbers = #tpu.dot_dimension_numbers<[1], [0], [0], [1], [0, 0, 1, 1], [], []>} : vector<16x128xbf16>, vector<128x128xbf16>, vector<16x128xf32> -> vector<16x128xf32>
    %c0_3 = arith.constant 0 : index
    %c0_4 = arith.constant 0 : index
    %3 = vector.load %arg3[%c0_3, %c0_4] : memref<1x128xf32, #tpu.memory_space<vmem>>, vector<1x128xf32>
    %4 = vector.broadcast %3 : vector<1x128xf32> to vector<16x128xf32>
    %5 = arith.addf %2, %4 : vector<16x128xf32>
    %c0_5 = arith.constant 0 : index
    %c0_6 = arith.constant 0 : index
    %6 = vector.load %arg4[%c0_5, %c0_6] : memref<16x128xf32, #tpu.memory_space<vmem>>, vector<16x128xf32>
    tpu.vector_store %arg4[%c0_5, %c0_6], %5 {strides = array<i32>} : memref<16x128xf32, #tpu.memory_space<vmem>>, vector<16x128xf32>,
    return
  }
  func.func @transform_0(%arg0: i32) -> (i32, i32) {
    %c0_i32 = arith.constant 0 : i32
    %c0_i32_0 = arith.constant 0 : i32
    %c0_i32_1 = arith.constant 0 : i32
    return %c0_i32, %c0_i32_0 : i32, i32
  }
  func.func @transform_1(%arg0: i32) -> (i32, i32) {
    %c0_i32 = arith.constant 0 : i32
    %c0_i32_0 = arith.constant 0 : i32
    return %c0_i32, %arg0 : i32, i32
  }
  func.func @transform_2(%arg0: i32) -> (i32, i32) {
    %c0_i32 = arith.constant 0 : i32
    %c0_i32_0 = arith.constant 0 : i32
    return %c0_i32, %arg0 : i32, i32
  }
  func.func @transform_3(%arg0: i32) -> (i32, i32) {
    %c0_i32 = arith.constant 0 : i32
    %c0_i32_0 = arith.constant 0 : i32
    return %c0_i32, %arg0 : i32, i32
  }
}

module attributes {stable_mosaic.version = 11 : i64} {
  func.func @kernel(%arg0: memref<8x8x128xf32, #tpu.memory_space<vmem>>, %arg1: memref<128x128xbf16, #tpu.memory_space<vmem>>, %arg2: memref<128x128xbf16, #tpu.memory_space<vmem>>, %arg3: memref<128x128xbf16, #tpu.memory_space<vmem>>, %arg4: memref<128x128xbf16, #tpu.memory_space<vmem>>, %arg5: memref<1x128xf32, #tpu.memory_space<vmem>>, %arg6: memref<1x128xf32, #tpu.memory_space<vmem>>, %arg7: memref<8x8x128xf32, #tpu.memory_space<vmem>>, %arg8: memref<2x8x128xf32, #tpu.memory_space<vmem>>, %arg9: memref<8x8x128xf32, #tpu.memory_space<vmem>>) attributes {dimension_semantics = [], scalar_prefetch = 0 : i64, scratch_operands = 1 : i64, tpu.core_type = #tpu.core_type<tc>} {
    %c0 = arith.constant 0 : index
    %c0_0 = arith.constant 0 : index
    %c0_1 = arith.constant 0 : index
    %0 = vector.load %arg0[%c0, %c0_0, %c0_1] : memref<8x8x128xf32, #tpu.memory_space<vmem>>, vector<8x8x128xf32>
    %1 = vector.shape_cast %0 : vector<8x8x128xf32> to vector<64x128xf32>
    %2 = arith.truncf %1 : vector<64x128xf32> to vector<64x128xbf16>
    %c0_2 = arith.constant 0 : index
    %c0_3 = arith.constant 0 : index
    %3 = vector.load %arg1[%c0_2, %c0_3] : memref<128x128xbf16, #tpu.memory_space<vmem>>, vector<128x128xbf16>
    %cst = arith.constant dense<0.000000e+00> : vector<64x128xf32>
    %4 = tpu.matmul %2, %3, %cst {dimension_numbers = #tpu.dot_dimension_numbers<[1], [0], [0], [1], [0, 0, 1, 1], [], []>} : vector<64x128xbf16>, vector<128x128xbf16>, vector<64x128xf32> -> vector<64x128xf32>
    %c0_4 = arith.constant 0 : index
    %c0_5 = arith.constant 0 : index
    %5 = vector.load %arg5[%c0_4, %c0_5] : memref<1x128xf32, #tpu.memory_space<vmem>>, vector<1x128xf32>
    %6 = vector.broadcast %5 : vector<1x128xf32> to vector<64x128xf32>
    %7 = arith.addf %4, %6 : vector<64x128xf32>
    %8 = vector.shape_cast %7 : vector<64x128xf32> to vector<8x8x128xf32>
    %c0_6 = arith.constant 0 : index
    %c0_7 = arith.constant 0 : index
    %c0_8 = arith.constant 0 : index
    %9 = vector.load %arg9[%c0_6, %c0_7, %c0_8] : memref<8x8x128xf32, #tpu.memory_space<vmem>>, vector<8x8x128xf32>
    tpu.vector_store %arg9[%c0_6, %c0_7, %c0_8], %8 {strides = array<i32>} : memref<8x8x128xf32, #tpu.memory_space<vmem>>, vector<8x8x128xf32>,
    %c0_9 = arith.constant 0 : index
    %c0_10 = arith.constant 0 : index
    %10 = vector.load %arg3[%c0_9, %c0_10] : memref<128x128xbf16, #tpu.memory_space<vmem>>, vector<128x128xbf16>
    %cst_11 = arith.constant 0.000000e+00 : f32
    %11 = vector.broadcast %cst_11 : f32 to vector<8x128xf32>
    %12 = arith.truncf %11 : vector<8x128xf32> to vector<8x128xbf16>
    %cst_12 = arith.constant dense<0.000000e+00> : vector<8x128xf32>
    %13 = tpu.matmul %12, %10, %cst_12 {dimension_numbers = #tpu.dot_dimension_numbers<[1], [0], [0], [1], [0, 0, 1, 1], [], []>} : vector<8x128xbf16>, vector<128x128xbf16>, vector<8x128xf32> -> vector<8x128xf32>
    %c0_13 = arith.constant 0 : index
    %c0_14 = arith.constant 0 : index
    %c0_15 = arith.constant 0 : index
    %14 = vector.load %arg9[%c0_13, %c0_14, %c0_15] : memref<8x8x128xf32, #tpu.memory_space<vmem>>, vector<1x8x128xf32>
    %15 = vector.shape_cast %14 : vector<1x8x128xf32> to vector<8x128xf32>
    %16 = arith.addf %13, %15 : vector<8x128xf32>
    %17 = math.tanh %16 : vector<8x128xf32>
    %c0_16 = arith.constant 0 : index
    %c0_17 = arith.constant 0 : index
    %c0_18 = arith.constant 0 : index
    %18 = vector.load %arg9[%c0_16, %c0_17, %c0_18] : memref<8x8x128xf32, #tpu.memory_space<vmem>>, vector<1x8x128xf32>
    %19 = vector.shape_cast %18 : vector<1x8x128xf32> to vector<8x128xf32>
    %20 = vector.shape_cast %17 : vector<8x128xf32> to vector<1x8x128xf32>
    tpu.vector_store %arg9[%c0_16, %c0_17, %c0_18], %20 {strides = array<i32>} : memref<8x8x128xf32, #tpu.memory_space<vmem>>, vector<1x8x128xf32>,
    %21 = arith.truncf %17 : vector<8x128xf32> to vector<8x128xbf16>
    %cst_19 = arith.constant dense<0.000000e+00> : vector<8x128xf32>
    %22 = tpu.matmul %21, %10, %cst_19 {dimension_numbers = #tpu.dot_dimension_numbers<[1], [0], [0], [1], [0, 0, 1, 1], [], []>} : vector<8x128xbf16>, vector<128x128xbf16>, vector<8x128xf32> -> vector<8x128xf32>
    %c1 = arith.constant 1 : index
    %c0_20 = arith.constant 0 : index
    %c0_21 = arith.constant 0 : index
    %23 = vector.load %arg9[%c1, %c0_20, %c0_21] : memref<8x8x128xf32, #tpu.memory_space<vmem>>, vector<1x8x128xf32>
    %24 = vector.shape_cast %23 : vector<1x8x128xf32> to vector<8x128xf32>
    %25 = arith.addf %22, %24 : vector<8x128xf32>
    %26 = math.tanh %25 : vector<8x128xf32>
    %c1_22 = arith.constant 1 : index
    %c0_23 = arith.constant 0 : index
    %c0_24 = arith.constant 0 : index
    %27 = vector.load %arg9[%c1_22, %c0_23, %c0_24] : memref<8x8x128xf32, #tpu.memory_space<vmem>>, vector<1x8x128xf32>
    %28 = vector.shape_cast %27 : vector<1x8x128xf32> to vector<8x128xf32>
    %29 = vector.shape_cast %26 : vector<8x128xf32> to vector<1x8x128xf32>
    tpu.vector_store %arg9[%c1_22, %c0_23, %c0_24], %29 {strides = array<i32>} : memref<8x8x128xf32, #tpu.memory_space<vmem>>, vector<1x8x128xf32>,
    %30 = arith.truncf %26 : vector<8x128xf32> to vector<8x128xbf16>
    %cst_25 = arith.constant dense<0.000000e+00> : vector<8x128xf32>
    %31 = tpu.matmul %30, %10, %cst_25 {dimension_numbers = #tpu.dot_dimension_numbers<[1], [0], [0], [1], [0, 0, 1, 1], [], []>} : vector<8x128xbf16>, vector<128x128xbf16>, vector<8x128xf32> -> vector<8x128xf32>
    %c2 = arith.constant 2 : index
    %c0_26 = arith.constant 0 : index
    %c0_27 = arith.constant 0 : index
    %32 = vector.load %arg9[%c2, %c0_26, %c0_27] : memref<8x8x128xf32, #tpu.memory_space<vmem>>, vector<1x8x128xf32>
    %33 = vector.shape_cast %32 : vector<1x8x128xf32> to vector<8x128xf32>
    %34 = arith.addf %31, %33 : vector<8x128xf32>
    %35 = math.tanh %34 : vector<8x128xf32>
    %c2_28 = arith.constant 2 : index
    %c0_29 = arith.constant 0 : index
    %c0_30 = arith.constant 0 : index
    %36 = vector.load %arg9[%c2_28, %c0_29, %c0_30] : memref<8x8x128xf32, #tpu.memory_space<vmem>>, vector<1x8x128xf32>
    %37 = vector.shape_cast %36 : vector<1x8x128xf32> to vector<8x128xf32>
    %38 = vector.shape_cast %35 : vector<8x128xf32> to vector<1x8x128xf32>
    tpu.vector_store %arg9[%c2_28, %c0_29, %c0_30], %38 {strides = array<i32>} : memref<8x8x128xf32, #tpu.memory_space<vmem>>, vector<1x8x128xf32>,
    %39 = arith.truncf %35 : vector<8x128xf32> to vector<8x128xbf16>
    %cst_31 = arith.constant dense<0.000000e+00> : vector<8x128xf32>
    %40 = tpu.matmul %39, %10, %cst_31 {dimension_numbers = #tpu.dot_dimension_numbers<[1], [0], [0], [1], [0, 0, 1, 1], [], []>} : vector<8x128xbf16>, vector<128x128xbf16>, vector<8x128xf32> -> vector<8x128xf32>
    %c3 = arith.constant 3 : index
    %c0_32 = arith.constant 0 : index
    %c0_33 = arith.constant 0 : index
    %41 = vector.load %arg9[%c3, %c0_32, %c0_33] : memref<8x8x128xf32, #tpu.memory_space<vmem>>, vector<1x8x128xf32>
    %42 = vector.shape_cast %41 : vector<1x8x128xf32> to vector<8x128xf32>
    %43 = arith.addf %40, %42 : vector<8x128xf32>
    %44 = math.tanh %43 : vector<8x128xf32>
    %c3_34 = arith.constant 3 : index
    %c0_35 = arith.constant 0 : index
    %c0_36 = arith.constant 0 : index
    %45 = vector.load %arg9[%c3_34, %c0_35, %c0_36] : memref<8x8x128xf32, #tpu.memory_space<vmem>>, vector<1x8x128xf32>
    %46 = vector.shape_cast %45 : vector<1x8x128xf32> to vector<8x128xf32>
    %47 = vector.shape_cast %44 : vector<8x128xf32> to vector<1x8x128xf32>
    tpu.vector_store %arg9[%c3_34, %c0_35, %c0_36], %47 {strides = array<i32>} : memref<8x8x128xf32, #tpu.memory_space<vmem>>, vector<1x8x128xf32>,
    %48 = arith.truncf %44 : vector<8x128xf32> to vector<8x128xbf16>
    %cst_37 = arith.constant dense<0.000000e+00> : vector<8x128xf32>
    %49 = tpu.matmul %48, %10, %cst_37 {dimension_numbers = #tpu.dot_dimension_numbers<[1], [0], [0], [1], [0, 0, 1, 1], [], []>} : vector<8x128xbf16>, vector<128x128xbf16>, vector<8x128xf32> -> vector<8x128xf32>
    %c4 = arith.constant 4 : index
    %c0_38 = arith.constant 0 : index
    %c0_39 = arith.constant 0 : index
    %50 = vector.load %arg9[%c4, %c0_38, %c0_39] : memref<8x8x128xf32, #tpu.memory_space<vmem>>, vector<1x8x128xf32>
    %51 = vector.shape_cast %50 : vector<1x8x128xf32> to vector<8x128xf32>
    %52 = arith.addf %49, %51 : vector<8x128xf32>
    %53 = math.tanh %52 : vector<8x128xf32>
    %c4_40 = arith.constant 4 : index
    %c0_41 = arith.constant 0 : index
    %c0_42 = arith.constant 0 : index
    %54 = vector.load %arg9[%c4_40, %c0_41, %c0_42] : memref<8x8x128xf32, #tpu.memory_space<vmem>>, vector<1x8x128xf32>
    %55 = vector.shape_cast %54 : vector<1x8x128xf32> to vector<8x128xf32>
    %56 = vector.shape_cast %53 : vector<8x128xf32> to vector<1x8x128xf32>
    tpu.vector_store %arg9[%c4_40, %c0_41, %c0_42], %56 {strides = array<i32>} : memref<8x8x128xf32, #tpu.memory_space<vmem>>, vector<1x8x128xf32>,
    %57 = arith.truncf %53 : vector<8x128xf32> to vector<8x128xbf16>
    %cst_43 = arith.constant dense<0.000000e+00> : vector<8x128xf32>
    %58 = tpu.matmul %57, %10, %cst_43 {dimension_numbers = #tpu.dot_dimension_numbers<[1], [0], [0], [1], [0, 0, 1, 1], [], []>} : vector<8x128xbf16>, vector<128x128xbf16>, vector<8x128xf32> -> vector<8x128xf32>
    %c5 = arith.constant 5 : index
    %c0_44 = arith.constant 0 : index
    %c0_45 = arith.constant 0 : index
    %59 = vector.load %arg9[%c5, %c0_44, %c0_45] : memref<8x8x128xf32, #tpu.memory_space<vmem>>, vector<1x8x128xf32>
    %60 = vector.shape_cast %59 : vector<1x8x128xf32> to vector<8x128xf32>
    %61 = arith.addf %58, %60 : vector<8x128xf32>
    %62 = math.tanh %61 : vector<8x128xf32>
    %c5_46 = arith.constant 5 : index
    %c0_47 = arith.constant 0 : index
    %c0_48 = arith.constant 0 : index
    %63 = vector.load %arg9[%c5_46, %c0_47, %c0_48] : memref<8x8x128xf32, #tpu.memory_space<vmem>>, vector<1x8x128xf32>
    %64 = vector.shape_cast %63 : vector<1x8x128xf32> to vector<8x128xf32>
    %65 = vector.shape_cast %62 : vector<8x128xf32> to vector<1x8x128xf32>
    tpu.vector_store %arg9[%c5_46, %c0_47, %c0_48], %65 {strides = array<i32>} : memref<8x8x128xf32, #tpu.memory_space<vmem>>, vector<1x8x128xf32>,
    %66 = arith.truncf %62 : vector<8x128xf32> to vector<8x128xbf16>
    %cst_49 = arith.constant dense<0.000000e+00> : vector<8x128xf32>
    %67 = tpu.matmul %66, %10, %cst_49 {dimension_numbers = #tpu.dot_dimension_numbers<[1], [0], [0], [1], [0, 0, 1, 1], [], []>} : vector<8x128xbf16>, vector<128x128xbf16>, vector<8x128xf32> -> vector<8x128xf32>
    %c6 = arith.constant 6 : index
    %c0_50 = arith.constant 0 : index
    %c0_51 = arith.constant 0 : index
    %68 = vector.load %arg9[%c6, %c0_50, %c0_51] : memref<8x8x128xf32, #tpu.memory_space<vmem>>, vector<1x8x128xf32>
    %69 = vector.shape_cast %68 : vector<1x8x128xf32> to vector<8x128xf32>
    %70 = arith.addf %67, %69 : vector<8x128xf32>
    %71 = math.tanh %70 : vector<8x128xf32>
    %c6_52 = arith.constant 6 : index
    %c0_53 = arith.constant 0 : index
    %c0_54 = arith.constant 0 : index
    %72 = vector.load %arg9[%c6_52, %c0_53, %c0_54] : memref<8x8x128xf32, #tpu.memory_space<vmem>>, vector<1x8x128xf32>
    %73 = vector.shape_cast %72 : vector<1x8x128xf32> to vector<8x128xf32>
    %74 = vector.shape_cast %71 : vector<8x128xf32> to vector<1x8x128xf32>
    tpu.vector_store %arg9[%c6_52, %c0_53, %c0_54], %74 {strides = array<i32>} : memref<8x8x128xf32, #tpu.memory_space<vmem>>, vector<1x8x128xf32>,
    %75 = arith.truncf %71 : vector<8x128xf32> to vector<8x128xbf16>
    %cst_55 = arith.constant dense<0.000000e+00> : vector<8x128xf32>
    %76 = tpu.matmul %75, %10, %cst_55 {dimension_numbers = #tpu.dot_dimension_numbers<[1], [0], [0], [1], [0, 0, 1, 1], [], []>} : vector<8x128xbf16>, vector<128x128xbf16>, vector<8x128xf32> -> vector<8x128xf32>
    %c7 = arith.constant 7 : index
    %c0_56 = arith.constant 0 : index
    %c0_57 = arith.constant 0 : index
    %77 = vector.load %arg9[%c7, %c0_56, %c0_57] : memref<8x8x128xf32, #tpu.memory_space<vmem>>, vector<1x8x128xf32>
    %78 = vector.shape_cast %77 : vector<1x8x128xf32> to vector<8x128xf32>
    %79 = arith.addf %76, %78 : vector<8x128xf32>
    %80 = math.tanh %79 : vector<8x128xf32>
    %c7_58 = arith.constant 7 : index
    %c0_59 = arith.constant 0 : index
    %c0_60 = arith.constant 0 : index
    %81 = vector.load %arg9[%c7_58, %c0_59, %c0_60] : memref<8x8x128xf32, #tpu.memory_space<vmem>>, vector<1x8x128xf32>
    %82 = vector.shape_cast %81 : vector<1x8x128xf32> to vector<8x128xf32>
    %83 = vector.shape_cast %80 : vector<8x128xf32> to vector<1x8x128xf32>
    tpu.vector_store %arg9[%c7_58, %c0_59, %c0_60], %83 {strides = array<i32>} : memref<8x8x128xf32, #tpu.memory_space<vmem>>, vector<1x8x128xf32>,
    %c0_61 = arith.constant 0 : index
    %c0_62 = arith.constant 0 : index
    %c0_63 = arith.constant 0 : index
    %84 = vector.load %arg8[%c0_61, %c0_62, %c0_63] : memref<2x8x128xf32, #tpu.memory_space<vmem>>, vector<1x8x128xf32>
    %85 = vector.shape_cast %84 : vector<1x8x128xf32> to vector<8x128xf32>
    %86 = vector.shape_cast %80 : vector<8x128xf32> to vector<1x8x128xf32>
    tpu.vector_store %arg8[%c0_61, %c0_62, %c0_63], %86 {strides = array<i32>} : memref<2x8x128xf32, #tpu.memory_space<vmem>>, vector<1x8x128xf32>,
    %c0_64 = arith.constant 0 : index
    %c0_65 = arith.constant 0 : index
    %c0_66 = arith.constant 0 : index
    %87 = vector.load %arg9[%c0_64, %c0_65, %c0_66] : memref<8x8x128xf32, #tpu.memory_space<vmem>>, vector<8x8x128xf32>
    %88 = vector.shape_cast %87 : vector<8x8x128xf32> to vector<64x128xf32>
    %89 = arith.truncf %88 : vector<64x128xf32> to vector<64x128xbf16>
    %c0_67 = arith.constant 0 : index
    %c0_68 = arith.constant 0 : index
    %90 = vector.load %arg2[%c0_67, %c0_68] : memref<128x128xbf16, #tpu.memory_space<vmem>>, vector<128x128xbf16>
    %cst_69 = arith.constant dense<0.000000e+00> : vector<64x128xf32>
    %91 = tpu.matmul %89, %90, %cst_69 {dimension_numbers = #tpu.dot_dimension_numbers<[1], [0], [0], [1], [0, 0, 1, 1], [], []>} : vector<64x128xbf16>, vector<128x128xbf16>, vector<64x128xf32> -> vector<64x128xf32>
    %c0_70 = arith.constant 0 : index
    %c0_71 = arith.constant 0 : index
    %92 = vector.load %arg6[%c0_70, %c0_71] : memref<1x128xf32, #tpu.memory_space<vmem>>, vector<1x128xf32>
    %93 = vector.broadcast %92 : vector<1x128xf32> to vector<64x128xf32>
    %94 = arith.addf %91, %93 : vector<64x128xf32>
    %95 = vector.shape_cast %94 : vector<64x128xf32> to vector<8x8x128xf32>
    %c0_72 = arith.constant 0 : index
    %c0_73 = arith.constant 0 : index
    %c0_74 = arith.constant 0 : index
    %96 = vector.load %arg7[%c0_72, %c0_73, %c0_74] : memref<8x8x128xf32, #tpu.memory_space<vmem>>, vector<8x8x128xf32>
    tpu.vector_store %arg7[%c0_72, %c0_73, %c0_74], %95 {strides = array<i32>} : memref<8x8x128xf32, #tpu.memory_space<vmem>>, vector<8x8x128xf32>,
    %c0_75 = arith.constant 0 : index
    %c0_76 = arith.constant 0 : index
    %97 = vector.load %arg4[%c0_75, %c0_76] : memref<128x128xbf16, #tpu.memory_space<vmem>>, vector<128x128xbf16>
    %cst_77 = arith.constant 0.000000e+00 : f32
    %98 = vector.broadcast %cst_77 : f32 to vector<8x128xf32>
    %99 = arith.truncf %98 : vector<8x128xf32> to vector<8x128xbf16>
    %cst_78 = arith.constant dense<0.000000e+00> : vector<8x128xf32>
    %100 = tpu.matmul %99, %97, %cst_78 {dimension_numbers = #tpu.dot_dimension_numbers<[1], [0], [0], [1], [0, 0, 1, 1], [], []>} : vector<8x128xbf16>, vector<128x128xbf16>, vector<8x128xf32> -> vector<8x128xf32>
    %c0_79 = arith.constant 0 : index
    %c0_80 = arith.constant 0 : index
    %c0_81 = arith.constant 0 : index
    %101 = vector.load %arg7[%c0_79, %c0_80, %c0_81] : memref<8x8x128xf32, #tpu.memory_space<vmem>>, vector<1x8x128xf32>
    %102 = vector.shape_cast %101 : vector<1x8x128xf32> to vector<8x128xf32>
    %103 = arith.addf %100, %102 : vector<8x128xf32>
    %104 = math.tanh %103 : vector<8x128xf32>
    %c0_82 = arith.constant 0 : index
    %c0_83 = arith.constant 0 : index
    %c0_84 = arith.constant 0 : index
    %105 = vector.load %arg7[%c0_82, %c0_83, %c0_84] : memref<8x8x128xf32, #tpu.memory_space<vmem>>, vector<1x8x128xf32>
    %106 = vector.shape_cast %105 : vector<1x8x128xf32> to vector<8x128xf32>
    %107 = vector.shape_cast %104 : vector<8x128xf32> to vector<1x8x128xf32>
    tpu.vector_store %arg7[%c0_82, %c0_83, %c0_84], %107 {strides = array<i32>} : memref<8x8x128xf32, #tpu.memory_space<vmem>>, vector<1x8x128xf32>,
    %108 = arith.truncf %104 : vector<8x128xf32> to vector<8x128xbf16>
    %cst_85 = arith.constant dense<0.000000e+00> : vector<8x128xf32>
    %109 = tpu.matmul %108, %97, %cst_85 {dimension_numbers = #tpu.dot_dimension_numbers<[1], [0], [0], [1], [0, 0, 1, 1], [], []>} : vector<8x128xbf16>, vector<128x128xbf16>, vector<8x128xf32> -> vector<8x128xf32>
    %c1_86 = arith.constant 1 : index
    %c0_87 = arith.constant 0 : index
    %c0_88 = arith.constant 0 : index
    %110 = vector.load %arg7[%c1_86, %c0_87, %c0_88] : memref<8x8x128xf32, #tpu.memory_space<vmem>>, vector<1x8x128xf32>
    %111 = vector.shape_cast %110 : vector<1x8x128xf32> to vector<8x128xf32>
    %112 = arith.addf %109, %111 : vector<8x128xf32>
    %113 = math.tanh %112 : vector<8x128xf32>
    %c1_89 = arith.constant 1 : index
    %c0_90 = arith.constant 0 : index
    %c0_91 = arith.constant 0 : index
    %114 = vector.load %arg7[%c1_89, %c0_90, %c0_91] : memref<8x8x128xf32, #tpu.memory_space<vmem>>, vector<1x8x128xf32>
    %115 = vector.shape_cast %114 : vector<1x8x128xf32> to vector<8x128xf32>
    %116 = vector.shape_cast %113 : vector<8x128xf32> to vector<1x8x128xf32>
    tpu.vector_store %arg7[%c1_89, %c0_90, %c0_91], %116 {strides = array<i32>} : memref<8x8x128xf32, #tpu.memory_space<vmem>>, vector<1x8x128xf32>,
    %117 = arith.truncf %113 : vector<8x128xf32> to vector<8x128xbf16>
    %cst_92 = arith.constant dense<0.000000e+00> : vector<8x128xf32>
    %118 = tpu.matmul %117, %97, %cst_92 {dimension_numbers = #tpu.dot_dimension_numbers<[1], [0], [0], [1], [0, 0, 1, 1], [], []>} : vector<8x128xbf16>, vector<128x128xbf16>, vector<8x128xf32> -> vector<8x128xf32>
    %c2_93 = arith.constant 2 : index
    %c0_94 = arith.constant 0 : index
    %c0_95 = arith.constant 0 : index
    %119 = vector.load %arg7[%c2_93, %c0_94, %c0_95] : memref<8x8x128xf32, #tpu.memory_space<vmem>>, vector<1x8x128xf32>
    %120 = vector.shape_cast %119 : vector<1x8x128xf32> to vector<8x128xf32>
    %121 = arith.addf %118, %120 : vector<8x128xf32>
    %122 = math.tanh %121 : vector<8x128xf32>
    %c2_96 = arith.constant 2 : index
    %c0_97 = arith.constant 0 : index
    %c0_98 = arith.constant 0 : index
    %123 = vector.load %arg7[%c2_96, %c0_97, %c0_98] : memref<8x8x128xf32, #tpu.memory_space<vmem>>, vector<1x8x128xf32>
    %124 = vector.shape_cast %123 : vector<1x8x128xf32> to vector<8x128xf32>
    %125 = vector.shape_cast %122 : vector<8x128xf32> to vector<1x8x128xf32>
    tpu.vector_store %arg7[%c2_96, %c0_97, %c0_98], %125 {strides = array<i32>} : memref<8x8x128xf32, #tpu.memory_space<vmem>>, vector<1x8x128xf32>,
    %126 = arith.truncf %122 : vector<8x128xf32> to vector<8x128xbf16>
    %cst_99 = arith.constant dense<0.000000e+00> : vector<8x128xf32>
    %127 = tpu.matmul %126, %97, %cst_99 {dimension_numbers = #tpu.dot_dimension_numbers<[1], [0], [0], [1], [0, 0, 1, 1], [], []>} : vector<8x128xbf16>, vector<128x128xbf16>, vector<8x128xf32> -> vector<8x128xf32>
    %c3_100 = arith.constant 3 : index
    %c0_101 = arith.constant 0 : index
    %c0_102 = arith.constant 0 : index
    %128 = vector.load %arg7[%c3_100, %c0_101, %c0_102] : memref<8x8x128xf32, #tpu.memory_space<vmem>>, vector<1x8x128xf32>
    %129 = vector.shape_cast %128 : vector<1x8x128xf32> to vector<8x128xf32>
    %130 = arith.addf %127, %129 : vector<8x128xf32>
    %131 = math.tanh %130 : vector<8x128xf32>
    %c3_103 = arith.constant 3 : index
    %c0_104 = arith.constant 0 : index
    %c0_105 = arith.constant 0 : index
    %132 = vector.load %arg7[%c3_103, %c0_104, %c0_105] : memref<8x8x128xf32, #tpu.memory_space<vmem>>, vector<1x8x128xf32>
    %133 = vector.shape_cast %132 : vector<1x8x128xf32> to vector<8x128xf32>
    %134 = vector.shape_cast %131 : vector<8x128xf32> to vector<1x8x128xf32>
    tpu.vector_store %arg7[%c3_103, %c0_104, %c0_105], %134 {strides = array<i32>} : memref<8x8x128xf32, #tpu.memory_space<vmem>>, vector<1x8x128xf32>,
    %135 = arith.truncf %131 : vector<8x128xf32> to vector<8x128xbf16>
    %cst_106 = arith.constant dense<0.000000e+00> : vector<8x128xf32>
    %136 = tpu.matmul %135, %97, %cst_106 {dimension_numbers = #tpu.dot_dimension_numbers<[1], [0], [0], [1], [0, 0, 1, 1], [], []>} : vector<8x128xbf16>, vector<128x128xbf16>, vector<8x128xf32> -> vector<8x128xf32>
    %c4_107 = arith.constant 4 : index
    %c0_108 = arith.constant 0 : index
    %c0_109 = arith.constant 0 : index
    %137 = vector.load %arg7[%c4_107, %c0_108, %c0_109] : memref<8x8x128xf32, #tpu.memory_space<vmem>>, vector<1x8x128xf32>
    %138 = vector.shape_cast %137 : vector<1x8x128xf32> to vector<8x128xf32>
    %139 = arith.addf %136, %138 : vector<8x128xf32>
    %140 = math.tanh %139 : vector<8x128xf32>
    %c4_110 = arith.constant 4 : index
    %c0_111 = arith.constant 0 : index
    %c0_112 = arith.constant 0 : index
    %141 = vector.load %arg7[%c4_110, %c0_111, %c0_112] : memref<8x8x128xf32, #tpu.memory_space<vmem>>, vector<1x8x128xf32>
    %142 = vector.shape_cast %141 : vector<1x8x128xf32> to vector<8x128xf32>
    %143 = vector.shape_cast %140 : vector<8x128xf32> to vector<1x8x128xf32>
    tpu.vector_store %arg7[%c4_110, %c0_111, %c0_112], %143 {strides = array<i32>} : memref<8x8x128xf32, #tpu.memory_space<vmem>>, vector<1x8x128xf32>,
    %144 = arith.truncf %140 : vector<8x128xf32> to vector<8x128xbf16>
    %cst_113 = arith.constant dense<0.000000e+00> : vector<8x128xf32>
    %145 = tpu.matmul %144, %97, %cst_113 {dimension_numbers = #tpu.dot_dimension_numbers<[1], [0], [0], [1], [0, 0, 1, 1], [], []>} : vector<8x128xbf16>, vector<128x128xbf16>, vector<8x128xf32> -> vector<8x128xf32>
    %c5_114 = arith.constant 5 : index
    %c0_115 = arith.constant 0 : index
    %c0_116 = arith.constant 0 : index
    %146 = vector.load %arg7[%c5_114, %c0_115, %c0_116] : memref<8x8x128xf32, #tpu.memory_space<vmem>>, vector<1x8x128xf32>
    %147 = vector.shape_cast %146 : vector<1x8x128xf32> to vector<8x128xf32>
    %148 = arith.addf %145, %147 : vector<8x128xf32>
    %149 = math.tanh %148 : vector<8x128xf32>
    %c5_117 = arith.constant 5 : index
    %c0_118 = arith.constant 0 : index
    %c0_119 = arith.constant 0 : index
    %150 = vector.load %arg7[%c5_117, %c0_118, %c0_119] : memref<8x8x128xf32, #tpu.memory_space<vmem>>, vector<1x8x128xf32>
    %151 = vector.shape_cast %150 : vector<1x8x128xf32> to vector<8x128xf32>
    %152 = vector.shape_cast %149 : vector<8x128xf32> to vector<1x8x128xf32>
    tpu.vector_store %arg7[%c5_117, %c0_118, %c0_119], %152 {strides = array<i32>} : memref<8x8x128xf32, #tpu.memory_space<vmem>>, vector<1x8x128xf32>,
    %153 = arith.truncf %149 : vector<8x128xf32> to vector<8x128xbf16>
    %cst_120 = arith.constant dense<0.000000e+00> : vector<8x128xf32>
    %154 = tpu.matmul %153, %97, %cst_120 {dimension_numbers = #tpu.dot_dimension_numbers<[1], [0], [0], [1], [0, 0, 1, 1], [], []>} : vector<8x128xbf16>, vector<128x128xbf16>, vector<8x128xf32> -> vector<8x128xf32>
    %c6_121 = arith.constant 6 : index
    %c0_122 = arith.constant 0 : index
    %c0_123 = arith.constant 0 : index
    %155 = vector.load %arg7[%c6_121, %c0_122, %c0_123] : memref<8x8x128xf32, #tpu.memory_space<vmem>>, vector<1x8x128xf32>
    %156 = vector.shape_cast %155 : vector<1x8x128xf32> to vector<8x128xf32>
    %157 = arith.addf %154, %156 : vector<8x128xf32>
    %158 = math.tanh %157 : vector<8x128xf32>
    %c6_124 = arith.constant 6 : index
    %c0_125 = arith.constant 0 : index
    %c0_126 = arith.constant 0 : index
    %159 = vector.load %arg7[%c6_124, %c0_125, %c0_126] : memref<8x8x128xf32, #tpu.memory_space<vmem>>, vector<1x8x128xf32>
    %160 = vector.shape_cast %159 : vector<1x8x128xf32> to vector<8x128xf32>
    %161 = vector.shape_cast %158 : vector<8x128xf32> to vector<1x8x128xf32>
    tpu.vector_store %arg7[%c6_124, %c0_125, %c0_126], %161 {strides = array<i32>} : memref<8x8x128xf32, #tpu.memory_space<vmem>>, vector<1x8x128xf32>,
    %162 = arith.truncf %158 : vector<8x128xf32> to vector<8x128xbf16>
    %cst_127 = arith.constant dense<0.000000e+00> : vector<8x128xf32>
    %163 = tpu.matmul %162, %97, %cst_127 {dimension_numbers = #tpu.dot_dimension_numbers<[1], [0], [0], [1], [0, 0, 1, 1], [], []>} : vector<8x128xbf16>, vector<128x128xbf16>, vector<8x128xf32> -> vector<8x128xf32>
    %c7_128 = arith.constant 7 : index
    %c0_129 = arith.constant 0 : index
    %c0_130 = arith.constant 0 : index
    %164 = vector.load %arg7[%c7_128, %c0_129, %c0_130] : memref<8x8x128xf32, #tpu.memory_space<vmem>>, vector<1x8x128xf32>
    %165 = vector.shape_cast %164 : vector<1x8x128xf32> to vector<8x128xf32>
    %166 = arith.addf %163, %165 : vector<8x128xf32>
    %167 = math.tanh %166 : vector<8x128xf32>
    %c7_131 = arith.constant 7 : index
    %c0_132 = arith.constant 0 : index
    %c0_133 = arith.constant 0 : index
    %168 = vector.load %arg7[%c7_131, %c0_132, %c0_133] : memref<8x8x128xf32, #tpu.memory_space<vmem>>, vector<1x8x128xf32>
    %169 = vector.shape_cast %168 : vector<1x8x128xf32> to vector<8x128xf32>
    %170 = vector.shape_cast %167 : vector<8x128xf32> to vector<1x8x128xf32>
    tpu.vector_store %arg7[%c7_131, %c0_132, %c0_133], %170 {strides = array<i32>} : memref<8x8x128xf32, #tpu.memory_space<vmem>>, vector<1x8x128xf32>,
    %c1_134 = arith.constant 1 : index
    %c0_135 = arith.constant 0 : index
    %c0_136 = arith.constant 0 : index
    %171 = vector.load %arg8[%c1_134, %c0_135, %c0_136] : memref<2x8x128xf32, #tpu.memory_space<vmem>>, vector<1x8x128xf32>
    %172 = vector.shape_cast %171 : vector<1x8x128xf32> to vector<8x128xf32>
    %173 = vector.shape_cast %167 : vector<8x128xf32> to vector<1x8x128xf32>
    tpu.vector_store %arg8[%c1_134, %c0_135, %c0_136], %173 {strides = array<i32>} : memref<2x8x128xf32, #tpu.memory_space<vmem>>, vector<1x8x128xf32>,
    return
  }
}

</mosaic_0001>

<llo_original>
// kernel: rnnlm_forward.3
$region0: #{rnnlm_forward.3}
  #allocation0 [shape = 'u32[]', space=smem, size = 0x4, offset = 0x4, fixed_abs, tag = 'smem constant byte address 0x4 - core index']
  #allocation1 [shape = 'u32[144,128]{1,0:T(1,128)}', space=vmem, size = 0x12000, scoped, tag = 'internal scratch']
  %s0 = inlined_call_operand.vmem [shape: bf16[16,128], index: 0, kind: input, shape index: {}]
  %s1 = inlined_call_operand.vmem [shape: bf16[128,128], index: 1, kind: input, shape index: {}]
  %s2 = inlined_call_operand.vmem [shape: f32[1,128], index: 2, kind: input, shape index: {}]
  %s3 = inlined_call_operand.hbm [shape: f32[16,128], index: 3, kind: output, shape index: {}]
  %s4 = sld [smem:[#allocation0]]
  $region22: #{rnnlm_forward.3} parent=0
    _
  %s6 = ssub.s32 1, %s4
  %s7 = scalar_select 0, %s6, %s4
  $region1: #{rnnlm_forward.3} parent=0
    #allocation2 [shape = 'u8[8192]{0}', space=vmem, size = 0x2000, scoped, tag = 'output window, operand 0, single buffered']
    #allocation3 [shape = 's32[1]{0}', space=sflag, size = 0x4, scoped, tag = 'scoped memory for rnnlm_forward.3']
    %8 = vsyncpa [#allocation3], 0
    // Predicated region
    $region2: #{rnnlm_forward.3} parent=1 // pred_check
      _
    $region3: #{rnnlm_forward.3} parent=1 // pred_check_branch
      %10 = sbr.rel (0) target = $region5
    $region4: #{rnnlm_forward.3} parent=1 // pred_region
      _
    $region5: #{rnnlm_forward.3} parent=1 // pred_fallthru
      _
    // Predicated region
    $region6: #{rnnlm_forward.3} parent=1 // pred_check
      _
    $region7: #{rnnlm_forward.3} parent=1 // pred_check_branch
      %12 = sbr.rel (0) target = $region9
    $region8: #{rnnlm_forward.3} parent=1 // pred_region
      _
    $region9: #{rnnlm_forward.3} parent=1 // pred_fallthru
      _
    // Predicated region
    $region10: #{rnnlm_forward.3} parent=1 // pred_check
      _
    $region11: #{rnnlm_forward.3} parent=1 // pred_check_branch
      %14 = sbr.rel (0) target = $region13
    $region12: #{rnnlm_forward.3} parent=1 // pred_region
      _
    $region13: #{rnnlm_forward.3} parent=1 // pred_fallthru
      _
    %v16 = vld [vmem:[%s0] sm:$0xf]
    %v17 = vld [vmem:[%s0 + $0x4] sm:$0xf]
    %v18 = vld [vmem:[%s1] sm:$0xf]
    %v19 = vld [vmem:[%s1 + $0x4] sm:$0xf]
    %v20 = vld [vmem:[%s1 + $0x8] sm:$0xf]
    %v21 = vld [vmem:[%s1 + $0xc] sm:$0xf]
    %v22 = vld [vmem:[%s1 + $0x10] sm:$0xf]
    %v23 = vld [vmem:[%s1 + $0x14] sm:$0xf]
    %v24 = vld [vmem:[%s1 + $0x18] sm:$0xf]
    %v25 = vld [vmem:[%s1 + $0x1c] sm:$0xf]
    %v26 = vld [vmem:[%s1 + $0x20] sm:$0xf]
    %v27 = vld [vmem:[%s1 + $0x24] sm:$0xf]
    %v28 = vld [vmem:[%s1 + $0x28] sm:$0xf]
    %v29 = vld [vmem:[%s1 + $0x2c] sm:$0xf]
    %v30 = vld [vmem:[%s1 + $0x30] sm:$0xf]
    %v31 = vld [vmem:[%s1 + $0x34] sm:$0xf]
    %v32 = vld [vmem:[%s1 + $0x38] sm:$0xf]
    %v33 = vld [vmem:[%s1 + $0x3c] sm:$0xf]
    %v34 = vld [vmem:[%s2] sm:$0x1]
    %v36 = vlaneseq
    %v37 = vshrl.u32 %v36, 7
    %v38 = vsub.s32 0, %v37
    %v39 = vrot.slane %v34, %v38
    %v43 = vunpack.c.l.b16 %v16
    %v44 = vunpack.c.l.b16 %v17
    %v45 = vpack.c.b16 %v44, %v43
    %v63 = vunpack.c.l.b16 %v18
    %v64 = vunpack.c.l.b16 %v19
    %v65 = vunpack.c.l.b16 %v20
    %v66 = vunpack.c.l.b16 %v21
    %v67 = vunpack.c.l.b16 %v22
    %v68 = vunpack.c.l.b16 %v23
    %v69 = vunpack.c.l.b16 %v24
    %v70 = vunpack.c.l.b16 %v25
    %v71 = vunpack.c.l.b16 %v26
    %v72 = vunpack.c.l.b16 %v27
    %v73 = vunpack.c.l.b16 %v28
    %v74 = vunpack.c.l.b16 %v29
    %v75 = vunpack.c.l.b16 %v30
    %v76 = vunpack.c.l.b16 %v31
    %v77 = vunpack.c.l.b16 %v32
    %v78 = vunpack.c.l.b16 %v33
    %v79 = vpack.c.b16 %v64, %v63
    %v80 = vpack.c.b16 %v66, %v65
    %v81 = vpack.c.b16 %v68, %v67
    %v82 = vpack.c.b16 %v70, %v69
    %v83 = vpack.c.b16 %v72, %v71
    %v84 = vpack.c.b16 %v74, %v73
    %v85 = vpack.c.b16 %v76, %v75
    %v86 = vpack.c.b16 %v78, %v77
    %95 = vmatprep.subr.bf16.mxu0 0
    %96 = vmatpush1.bf16.msra.mxu0 %v79
    %97 = vmatprep.subr.bf16.mxu0 0
    %98 = vmatpush1.bf16.msra.mxu0 %v80
    %99 = vmatprep.subr.bf16.mxu0 0
    %100 = vmatpush1.bf16.msra.mxu0 %v81
    %101 = vmatprep.subr.bf16.mxu0 0
    %102 = vmatpush1.bf16.msra.mxu0 %v82
    %103 = vmatprep.subr.bf16.mxu0 0
    %104 = vmatpush1.bf16.msra.mxu0 %v83
    %105 = vmatprep.subr.bf16.mxu0 0
    %106 = vmatpush1.bf16.msra.mxu0 %v84
    %107 = vmatprep.subr.bf16.mxu0 0
    %108 = vmatpush1.bf16.msra.mxu0 %v85
    %109 = vmatprep.subr.bf16.mxu0 0
    %110 = vmatpush1.bf16.msra.mxu0 %v86
    %111 = vmatprep.subr.bf16.mxu0 0
    %112 = vmatpush1.bf16.msra.mxu0 0
    %113 = vmatprep.subr.bf16.mxu0 0
    %114 = vmatpush1.bf16.msra.mxu0 0
    %115 = vmatprep.subr.bf16.mxu0 0
    %116 = vmatpush1.bf16.msra.mxu0 0
    %117 = vmatprep.subr.bf16.mxu0 0
    %118 = vmatpush1.bf16.msra.mxu0 0
    %119 = vmatprep.subr.bf16.mxu0 0
    %120 = vmatpush1.bf16.msra.mxu0 0
    %121 = vmatprep.subr.bf16.mxu0 0
    %122 = vmatpush1.bf16.msra.mxu0 0
    %123 = vmatprep.subr.bf16.mxu0 0
    %124 = vmatpush1.bf16.msra.mxu0 0
    %125 = vmatprep.subr.bf16.mxu0 0
    %126 = vmatpush1.bf16.msra.mxu0 0
    %127 = vmatprep.mubr.bf16.mxu0 0
    %128 = vmatmul.mubr.bf16.gmra.mrb[0].mxu0 %v45
    %v129 = vpop.f32.mrb[0].mxu0
    %v130 = vadd.f32 %v39, %v129
    %v131 = vpop.f32.mrb[0].mxu0
    %v132 = vpop.f32.mrb[0].mxu0
    %v133 = vadd.f32 %v39, %v132
    %v134 = vpop.f32.mrb[0].mxu0
    %135 = vdwg.mxu0
    %136 = vst [vmem:[#allocation2] sm:$0xff] %v130
    %137 = vst [vmem:[#allocation2 + $0x8] sm:$0xff] %v133
    // Predicated region
    $region14: #{rnnlm_forward.3} parent=1 // pred_check
      _
    $region15: #{rnnlm_forward.3} parent=1 // pred_check_branch
      %139 = sbr.rel (0) target = $region17
    $region16: #{rnnlm_forward.3} parent=1 // pred_region
      %s141 = ssub.s32 256, 256
      %142 = vsyncadd [#allocation3], %s141
      %s143 = sshll.u32 [#allocation2], 4
      %s144 = int_to_ptr.vmem [resolvable:$true] %s143
      %149 = dma.vmem_to_hbm [thread:$0]  %s144, 256, %s3, [#allocation3], 128, 128, 8
    $region17: #{rnnlm_forward.3} parent=1 // pred_fallthru
      _
    // Predicated region
    $region18: #{rnnlm_forward.3} parent=1 // pred_check
      _
    $region19: #{rnnlm_forward.3} parent=1 // pred_check_branch
      %151 = sbr.rel (0) target = $region21
    $region20: #{rnnlm_forward.3} parent=1 // pred_region
      %152 = dma.done [#allocation3], 256
    $region21: #{rnnlm_forward.3} parent=1 // pred_fallthru
      _
    %153 = vsyncpa [#allocation3], 1

// kernel: rnnlm_forward.2
$region0: #{rnnlm_forward.2}
  #allocation0 [shape = 'u32[]', space=smem, size = 0x4, offset = 0x4, fixed_abs, tag = 'smem constant byte address 0x4 - core index']
  #allocation1 [shape = 'u32[144,128]{1,0:T(1,128)}', space=vmem, size = 0x12000, scoped, tag = 'internal scratch']
  #allocation2 [shape = 'f32[8,8,128]{2,1,0:T(8,128)}', space=vmem, size = 0x8000, scoped, tag = 'scratch operand']
  %s0 = inlined_call_operand.vmem [shape: f32[8,8,128], index: 0, kind: input, shape index: {}]
  %s1 = inlined_call_operand.vmem [shape: bf16[128,128], index: 1, kind: input, shape index: {}]
  %s2 = inlined_call_operand.vmem [shape: bf16[128,128], index: 2, kind: input, shape index: {}]
  %s3 = inlined_call_operand.vmem [shape: bf16[128,128], index: 3, kind: input, shape index: {}]
  %s4 = inlined_call_operand.vmem [shape: bf16[128,128], index: 4, kind: input, shape index: {}]
  %s5 = inlined_call_operand.vmem [shape: f32[1,128], index: 5, kind: input, shape index: {}]
  %s6 = inlined_call_operand.vmem [shape: f32[1,128], index: 6, kind: input, shape index: {}]
  %s7 = inlined_call_operand.vmem [shape: f32[8,8,128], index: 7, kind: output, shape index: {0}]
  %s8 = inlined_call_operand.vmem [shape: f32[2,8,128], index: 8, kind: output, shape index: {1}]
  %9 = xla_tuple %s7, %s8
  %s10 = sld [smem:[#allocation0]]
  $region46: #{rnnlm_forward.2} parent=0
    _
  %s12 = ssub.s32 1, %s10
  %s13 = scalar_select 0, %s12, %s10
  // Predicated region
  $region2: #{rnnlm_forward.2} parent=0 // pred_check
    _
  $region3: #{rnnlm_forward.2} parent=0 // pred_check_branch
    %15 = sbr.rel (0) target = $region5
  $region4: #{rnnlm_forward.2} parent=0 // pred_region
    _
  $region5: #{rnnlm_forward.2} parent=0 // pred_fallthru
    _
  // Predicated region
  $region6: #{rnnlm_forward.2} parent=0 // pred_check
    _
  $region7: #{rnnlm_forward.2} parent=0 // pred_check_branch
    %17 = sbr.rel (0) target = $region9
  $region8: #{rnnlm_forward.2} parent=0 // pred_region
    _
  $region9: #{rnnlm_forward.2} parent=0 // pred_fallthru
    _
  // Predicated region
  $region10: #{rnnlm_forward.2} parent=0 // pred_check
    _
  $region11: #{rnnlm_forward.2} parent=0 // pred_check_branch
    %19 = sbr.rel (0) target = $region13
  $region12: #{rnnlm_forward.2} parent=0 // pred_region
    _
  $region13: #{rnnlm_forward.2} parent=0 // pred_fallthru
    _
  // Predicated region
  $region14: #{rnnlm_forward.2} parent=0 // pred_check
    _
  $region15: #{rnnlm_forward.2} parent=0 // pred_check_branch
    %21 = sbr.rel (0) target = $region17
  $region16: #{rnnlm_forward.2} parent=0 // pred_region
    _
  $region17: #{rnnlm_forward.2} parent=0 // pred_fallthru
    _
  // Predicated region
  $region18: #{rnnlm_forward.2} parent=0 // pred_check
    _
  $region19: #{rnnlm_forward.2} parent=0 // pred_check_branch
    %23 = sbr.rel (0) target = $region21
  $region20: #{rnnlm_forward.2} parent=0 // pred_region
    _
  $region21: #{rnnlm_forward.2} parent=0 // pred_fallthru
    _
  // Predicated region
  $region22: #{rnnlm_forward.2} parent=0 // pred_check
    _
  $region23: #{rnnlm_forward.2} parent=0 // pred_check_branch
    %25 = sbr.rel (0) target = $region25
  $region24: #{rnnlm_forward.2} parent=0 // pred_region
    _
  $region25: #{rnnlm_forward.2} parent=0 // pred_fallthru
    _
  // Predicated region
  $region26: #{rnnlm_forward.2} parent=0 // pred_check
    _
  $region27: #{rnnlm_forward.2} parent=0 // pred_check_branch
    %27 = sbr.rel (0) target = $region29
  $region28: #{rnnlm_forward.2} parent=0 // pred_region
    _
  $region29: #{rnnlm_forward.2} parent=0 // pred_fallthru
    _
  %v29 = vld [vmem:[%s0] sm:$0xff]
  %v30 = vld [vmem:[%s0 + $0x8] sm:$0xff]
  %v31 = vld [vmem:[%s0 + $0x10] sm:$0xff]
  %v32 = vld [vmem:[%s0 + $0x18] sm:$0xff]
  %v33 = vld [vmem:[%s0 + $0x20] sm:$0xff]
  %v34 = vld [vmem:[%s0 + $0x28] sm:$0xff]
  %v35 = vld [vmem:[%s0 + $0x30] sm:$0xff]
  %v36 = vld [vmem:[%s0 + $0x38] sm:$0xff]
  %v37 = vpack.c.bf16 %v30, %v29
  %v38 = vpack.c.bf16 %v32, %v31
  %v39 = vpack.c.bf16 %v34, %v33
  %v40 = vpack.c.bf16 %v36, %v35
  %v41 = vld [vmem:[%s1] sm:$0xf]
  %v42 = vld [vmem:[%s1 + $0x4] sm:$0xf]
  %v43 = vld [vmem:[%s1 + $0x8] sm:$0xf]
  %v44 = vld [vmem:[%s1 + $0xc] sm:$0xf]
  %v45 = vld [vmem:[%s1 + $0x10] sm:$0xf]
  %v46 = vld [vmem:[%s1 + $0x14] sm:$0xf]
  %v47 = vld [vmem:[%s1 + $0x18] sm:$0xf]
  %v48 = vld [vmem:[%s1 + $0x1c] sm:$0xf]
  %v49 = vld [vmem:[%s1 + $0x20] sm:$0xf]
  %v50 = vld [vmem:[%s1 + $0x24] sm:$0xf]
  %v51 = vld [vmem:[%s1 + $0x28] sm:$0xf]
  %v52 = vld [vmem:[%s1 + $0x2c] sm:$0xf]
  %v53 = vld [vmem:[%s1 + $0x30] sm:$0xf]
  %v54 = vld [vmem:[%s1 + $0x34] sm:$0xf]
  %v55 = vld [vmem:[%s1 + $0x38] sm:$0xf]
  %v56 = vld [vmem:[%s1 + $0x3c] sm:$0xf]
  %v57 = vld [vmem:[%s5] sm:$0x1]
  %v59 = vlaneseq
  %v60 = vshrl.u32 %v59, 7
  %v61 = vsub.s32 0, %v60
  %v62 = vrot.slane %v57, %v61
  %v80 = vunpack.c.l.b16 %v41
  %v81 = vunpack.c.l.b16 %v42
  %v82 = vunpack.c.l.b16 %v43
  %v83 = vunpack.c.l.b16 %v44
  %v84 = vunpack.c.l.b16 %v45
  %v85 = vunpack.c.l.b16 %v46
  %v86 = vunpack.c.l.b16 %v47
  %v87 = vunpack.c.l.b16 %v48
  %v88 = vunpack.c.l.b16 %v49
  %v89 = vunpack.c.l.b16 %v50
  %v90 = vunpack.c.l.b16 %v51
  %v91 = vunpack.c.l.b16 %v52
  %v92 = vunpack.c.l.b16 %v53
  %v93 = vunpack.c.l.b16 %v54
  %v94 = vunpack.c.l.b16 %v55
  %v95 = vunpack.c.l.b16 %v56
  %v96 = vpack.c.b16 %v81, %v80
  %v97 = vpack.c.b16 %v83, %v82
  %v98 = vpack.c.b16 %v85, %v84
  %v99 = vpack.c.b16 %v87, %v86
  %v100 = vpack.c.b16 %v89, %v88
  %v101 = vpack.c.b16 %v91, %v90
  %v102 = vpack.c.b16 %v93, %v92
  %v103 = vpack.c.b16 %v95, %v94
  %112 = vmatprep.subr.bf16.mxu0 0
  %113 = vmatpush1.bf16.msra.mxu0 %v96
  %114 = vmatprep.subr.bf16.mxu0 0
  %115 = vmatpush1.bf16.msra.mxu0 %v97
  %116 = vmatprep.subr.bf16.mxu0 0
  %117 = vmatpush1.bf16.msra.mxu0 %v98
  %118 = vmatprep.subr.bf16.mxu0 0
  %119 = vmatpush1.bf16.msra.mxu0 %v99
  %120 = vmatprep.subr.bf16.mxu0 0
  %121 = vmatpush1.bf16.msra.mxu0 %v100
  %122 = vmatprep.subr.bf16.mxu0 0
  %123 = vmatpush1.bf16.msra.mxu0 %v101
  %124 = vmatprep.subr.bf16.mxu0 0
  %125 = vmatpush1.bf16.msra.mxu0 %v102
  %126 = vmatprep.subr.bf16.mxu0 0
  %127 = vmatpush1.bf16.msra.mxu0 %v103
  %128 = vmatprep.subr.bf16.mxu0 0
  %129 = vmatpush1.bf16.msra.mxu0 0
  %130 = vmatprep.subr.bf16.mxu0 0
  %131 = vmatpush1.bf16.msra.mxu0 0
  %132 = vmatprep.subr.bf16.mxu0 0
  %133 = vmatpush1.bf16.msra.mxu0 0
  %134 = vmatprep.subr.bf16.mxu0 0
  %135 = vmatpush1.bf16.msra.mxu0 0
  %136 = vmatprep.subr.bf16.mxu0 0
  %137 = vmatpush1.bf16.msra.mxu0 0
  %138 = vmatprep.subr.bf16.mxu0 0
  %139 = vmatpush1.bf16.msra.mxu0 0
  %140 = vmatprep.subr.bf16.mxu0 0
  %141 = vmatpush1.bf16.msra.mxu0 0
  %142 = vmatprep.subr.bf16.mxu0 0
  %143 = vmatpush1.bf16.msra.mxu0 0
  %144 = vmatprep.mubr.bf16.mxu0 0
  %145 = vmatmul.mubr.bf16.gmra.mrb[0].mxu0 %v37
  %v146 = vpop.f32.mrb[0].mxu0
  %v147 = vadd.f32 %v62, %v146
  %v148 = vpop.f32.mrb[0].mxu0
  %v149 = vpop.f32.mrb[0].mxu0
  %v150 = vadd.f32 %v62, %v149
  %v151 = vpop.f32.mrb[0].mxu0
  %152 = vmatprep.mubr.bf16.mxu0 0
  %153 = vmatmul.mubr.bf16.gmra.mrb[0].mxu0 %v38
  %v154 = vpop.f32.mrb[0].mxu0
  %v155 = vadd.f32 %v62, %v154
  %v156 = vpop.f32.mrb[0].mxu0
  %v157 = vpop.f32.mrb[0].mxu0
  %v158 = vadd.f32 %v62, %v157
  %v159 = vpop.f32.mrb[0].mxu0
  %160 = vmatprep.mubr.bf16.mxu0 0
  %161 = vmatmul.mubr.bf16.gmra.mrb[0].mxu0 %v39
  %v162 = vpop.f32.mrb[0].mxu0
  %v163 = vadd.f32 %v62, %v162
  %v164 = vpop.f32.mrb[0].mxu0
  %v165 = vpop.f32.mrb[0].mxu0
  %v166 = vadd.f32 %v62, %v165
  %v167 = vpop.f32.mrb[0].mxu0
  %168 = vmatprep.mubr.bf16.mxu0 0
  %169 = vmatmul.mubr.bf16.gmra.mrb[0].mxu0 %v40
  %v170 = vpop.f32.mrb[0].mxu0
  %v171 = vadd.f32 %v62, %v170
  %v172 = vpop.f32.mrb[0].mxu0
  %v173 = vpop.f32.mrb[0].mxu0
  %v174 = vadd.f32 %v62, %v173
  %v175 = vpop.f32.mrb[0].mxu0
  %176 = vdwg.mxu0
  %177 = vst [vmem:[#allocation2] sm:$0xff] %v147
  %178 = vst [vmem:[#allocation2 + $0x8] sm:$0xff] %v150
  %179 = vst [vmem:[#allocation2 + $0x10] sm:$0xff] %v155
  %180 = vst [vmem:[#allocation2 + $0x18] sm:$0xff] %v158
  %181 = vst [vmem:[#allocation2 + $0x20] sm:$0xff] %v163
  %182 = vst [vmem:[#allocation2 + $0x28] sm:$0xff] %v166
  %183 = vst [vmem:[#allocation2 + $0x30] sm:$0xff] %v171
  %184 = vst [vmem:[#allocation2 + $0x38] sm:$0xff] %v174
  %v185 = vld [vmem:[%s3] sm:$0xf]
  %v186 = vld [vmem:[%s3 + $0x4] sm:$0xf]
  %v187 = vld [vmem:[%s3 + $0x8] sm:$0xf]
  %v188 = vld [vmem:[%s3 + $0xc] sm:$0xf]
  %v189 = vld [vmem:[%s3 + $0x10] sm:$0xf]
  %v190 = vld [vmem:[%s3 + $0x14] sm:$0xf]
  %v191 = vld [vmem:[%s3 + $0x18] sm:$0xf]
  %v192 = vld [vmem:[%s3 + $0x1c] sm:$0xf]
  %v193 = vld [vmem:[%s3 + $0x20] sm:$0xf]
  %v194 = vld [vmem:[%s3 + $0x24] sm:$0xf]
  %v195 = vld [vmem:[%s3 + $0x28] sm:$0xf]
  %v196 = vld [vmem:[%s3 + $0x2c] sm:$0xf]
  %v197 = vld [vmem:[%s3 + $0x30] sm:$0xf]
  %v198 = vld [vmem:[%s3 + $0x34] sm:$0xf]
  %v199 = vld [vmem:[%s3 + $0x38] sm:$0xf]
  %v200 = vld [vmem:[%s3 + $0x3c] sm:$0xf]
  %v201 = vld [vmem:[#allocation2] sm:$0xff]
  %v218 = vunpack.c.l.b16 %v185
  %v219 = vunpack.c.l.b16 %v186
  %v220 = vunpack.c.l.b16 %v187
  %v221 = vunpack.c.l.b16 %v188
  %v222 = vunpack.c.l.b16 %v189
  %v223 = vunpack.c.l.b16 %v190
  %v224 = vunpack.c.l.b16 %v191
  %v225 = vunpack.c.l.b16 %v192
  %v226 = vunpack.c.l.b16 %v193
  %v227 = vunpack.c.l.b16 %v194
  %v228 = vunpack.c.l.b16 %v195
  %v229 = vunpack.c.l.b16 %v196
  %v230 = vunpack.c.l.b16 %v197
  %v231 = vunpack.c.l.b16 %v198
  %v232 = vunpack.c.l.b16 %v199
  %v233 = vunpack.c.l.b16 %v200
  %v234 = vpack.c.b16 %v219, %v218
  %v235 = vpack.c.b16 %v221, %v220
  %v236 = vpack.c.b16 %v223, %v222
  %v237 = vpack.c.b16 %v225, %v224
  %v238 = vpack.c.b16 %v227, %v226
  %v239 = vpack.c.b16 %v229, %v228
  %v240 = vpack.c.b16 %v231, %v230
  %v241 = vpack.c.b16 %v233, %v232
  %250 = vmatprep.subr.bf16.mxu0 0
  %251 = vmatpush1.bf16.msra.mxu0 %v234
  %252 = vmatprep.subr.bf16.mxu0 0
  %253 = vmatpush1.bf16.msra.mxu0 %v235
  %254 = vmatprep.subr.bf16.mxu0 0
  %255 = vmatpush1.bf16.msra.mxu0 %v236
  %256 = vmatprep.subr.bf16.mxu0 0
  %257 = vmatpush1.bf16.msra.mxu0 %v237
  %258 = vmatprep.subr.bf16.mxu0 0
  %259 = vmatpush1.bf16.msra.mxu0 %v238
  %260 = vmatprep.subr.bf16.mxu0 0
  %261 = vmatpush1.bf16.msra.mxu0 %v239
  %262 = vmatprep.subr.bf16.mxu0 0
  %263 = vmatpush1.bf16.msra.mxu0 %v240
  %264 = vmatprep.subr.bf16.mxu0 0
  %265 = vmatpush1.bf16.msra.mxu0 %v241
  %266 = vmatprep.subr.bf16.mxu0 0
  %267 = vmatpush1.bf16.msra.mxu0 0
  %268 = vmatprep.subr.bf16.mxu0 0
  %269 = vmatpush1.bf16.msra.mxu0 0
  %270 = vmatprep.subr.bf16.mxu0 0
  %271 = vmatpush1.bf16.msra.mxu0 0
  %272 = vmatprep.subr.bf16.mxu0 0
  %273 = vmatpush1.bf16.msra.mxu0 0
  %274 = vmatprep.subr.bf16.mxu0 0
  %275 = vmatpush1.bf16.msra.mxu0 0
  %276 = vmatprep.subr.bf16.mxu0 0
  %277 = vmatpush1.bf16.msra.mxu0 0
  %278 = vmatprep.subr.bf16.mxu0 0
  %279 = vmatpush1.bf16.msra.mxu0 0
  %280 = vmatprep.subr.bf16.mxu0 0
  %281 = vmatpush1.bf16.msra.mxu0 0
  %282 = vmatprep.mubr.bf16.mxu0 0
  %283 = vmatmul.mubr.bf16.gmra.mrb[0].mxu0 0
  %v284 = vpop.f32.mrb[0].mxu0
  %v285 = vadd.f32 %v201, %v284
  %v286 = vpop.f32.mrb[0].mxu0
  %v287 = vpop.f32.mrb[0].mxu0
  %v288 = vpop.f32.mrb[0].mxu0
  %289 = vdwg.mxu0
  %v290 = vtanh.pop %v285
  %291 = vst [vmem:[#allocation2] sm:$0xff] %v290
  %v292 = vpack.c.bf16 %v290, %v290
  %s293 = scalar_lea.vmem [#allocation2], 8
  %v294 = vld [vmem:[%s293] sm:$0xff]
  %295 = vmatprep.subr.bf16.mxu0 0
  %296 = vmatpush1.bf16.msra.mxu0 %v234
  %297 = vmatprep.subr.bf16.mxu0 0
  %298 = vmatpush1.bf16.msra.mxu0 %v235
  %299 = vmatprep.subr.bf16.mxu0 0
  %300 = vmatpush1.bf16.msra.mxu0 %v236
  %301 = vmatprep.subr.bf16.mxu0 0
  %302 = vmatpush1.bf16.msra.mxu0 %v237
  %303 = vmatprep.subr.bf16.mxu0 0
  %304 = vmatpush1.bf16.msra.mxu0 %v238
  %305 = vmatprep.subr.bf16.mxu0 0
  %306 = vmatpush1.bf16.msra.mxu0 %v239
  %307 = vmatprep.subr.bf16.mxu0 0
  %308 = vmatpush1.bf16.msra.mxu0 %v240
  %309 = vmatprep.subr.bf16.mxu0 0
  %310 = vmatpush1.bf16.msra.mxu0 %v241
  %311 = vmatprep.subr.bf16.mxu0 0
  %312 = vmatpush1.bf16.msra.mxu0 0
  %313 = vmatprep.subr.bf16.mxu0 0
  %314 = vmatpush1.bf16.msra.mxu0 0
  %315 = vmatprep.subr.bf16.mxu0 0
  %316 = vmatpush1.bf16.msra.mxu0 0
  %317 = vmatprep.subr.bf16.mxu0 0
  %318 = vmatpush1.bf16.msra.mxu0 0
  %319 = vmatprep.subr.bf16.mxu0 0
  %320 = vmatpush1.bf16.msra.mxu0 0
  %321 = vmatprep.subr.bf16.mxu0 0
  %322 = vmatpush1.bf16.msra.mxu0 0
  %323 = vmatprep.subr.bf16.mxu0 0
  %324 = vmatpush1.bf16.msra.mxu0 0
  %325 = vmatprep.subr.bf16.mxu0 0
  %326 = vmatpush1.bf16.msra.mxu0 0
  %327 = vmatprep.mubr.bf16.mxu0 0
  %328 = vmatmul.mubr.bf16.gmra.mrb[0].mxu0 %v292
  %v329 = vpop.f32.mrb[0].mxu0
  %v330 = vadd.f32 %v294, %v329
  %v331 = vpop.f32.mrb[0].mxu0
  %v332 = vpop.f32.mrb[0].mxu0
  %v333 = vpop.f32.mrb[0].mxu0
  %334 = vdwg.mxu0
  %v335 = vtanh.pop %v330
  %336 = vst [vmem:[%s293] sm:$0xff] %v335
  %v337 = vpack.c.bf16 %v335, %v335
  %s338 = scalar_lea.vmem [#allocation2], 16
  %v339 = vld [vmem:[%s338] sm:$0xff]
  %340 = vmatprep.subr.bf16.mxu0 0
  %341 = vmatpush1.bf16.msra.mxu0 %v234
  %342 = vmatprep.subr.bf16.mxu0 0
  %343 = vmatpush1.bf16.msra.mxu0 %v235
  %344 = vmatprep.subr.bf16.mxu0 0
  %345 = vmatpush1.bf16.msra.mxu0 %v236
  %346 = vmatprep.subr.bf16.mxu0 0
  %347 = vmatpush1.bf16.msra.mxu0 %v237
  %348 = vmatprep.subr.bf16.mxu0 0
  %349 = vmatpush1.bf16.msra.mxu0 %v238
  %350 = vmatprep.subr.bf16.mxu0 0
  %351 = vmatpush1.bf16.msra.mxu0 %v239
  %352 = vmatprep.subr.bf16.mxu0 0
  %353 = vmatpush1.bf16.msra.mxu0 %v240
  %354 = vmatprep.subr.bf16.mxu0 0
  %355 = vmatpush1.bf16.msra.mxu0 %v241
  %356 = vmatprep.subr.bf16.mxu0 0
  %357 = vmatpush1.bf16.msra.mxu0 0
  %358 = vmatprep.subr.bf16.mxu0 0
  %359 = vmatpush1.bf16.msra.mxu0 0
  %360 = vmatprep.subr.bf16.mxu0 0
  %361 = vmatpush1.bf16.msra.mxu0 0
  %362 = vmatprep.subr.bf16.mxu0 0
  %363 = vmatpush1.bf16.msra.mxu0 0
  %364 = vmatprep.subr.bf16.mxu0 0
  %365 = vmatpush1.bf16.msra.mxu0 0
  %366 = vmatprep.subr.bf16.mxu0 0
  %367 = vmatpush1.bf16.msra.mxu0 0
  %368 = vmatprep.subr.bf16.mxu0 0
  %369 = vmatpush1.bf16.msra.mxu0 0
  %370 = vmatprep.subr.bf16.mxu0 0
  %371 = vmatpush1.bf16.msra.mxu0 0
  %372 = vmatprep.mubr.bf16.mxu0 0
  %373 = vmatmul.mubr.bf16.gmra.mrb[0].mxu0 %v337
  %v374 = vpop.f32.mrb[0].mxu0
  %v375 = vadd.f32 %v339, %v374
  %v376 = vpop.f32.mrb[0].mxu0
  %v377 = vpop.f32.mrb[0].mxu0
  %v378 = vpop.f32.mrb[0].mxu0
  %379 = vdwg.mxu0
  %v380 = vtanh.pop %v375
  %381 = vst [vmem:[%s338] sm:$0xff] %v380
  %v382 = vpack.c.bf16 %v380, %v380
  %s383 = scalar_lea.vmem [#allocation2], 24
  %v384 = vld [vmem:[%s383] sm:$0xff]
  %385 = vmatprep.subr.bf16.mxu0 0
  %386 = vmatpush1.bf16.msra.mxu0 %v234
  %387 = vmatprep.subr.bf16.mxu0 0
  %388 = vmatpush1.bf16.msra.mxu0 %v235
  %389 = vmatprep.subr.bf16.mxu0 0
  %390 = vmatpush1.bf16.msra.mxu0 %v236
  %391 = vmatprep.subr.bf16.mxu0 0
  %392 = vmatpush1.bf16.msra.mxu0 %v237
  %393 = vmatprep.subr.bf16.mxu0 0
  %394 = vmatpush1.bf16.msra.mxu0 %v238
  %395 = vmatprep.subr.bf16.mxu0 0
  %396 = vmatpush1.bf16.msra.mxu0 %v239
  %397 = vmatprep.subr.bf16.mxu0 0
  %398 = vmatpush1.bf16.msra.mxu0 %v240
  %399 = vmatprep.subr.bf16.mxu0 0
  %400 = vmatpush1.bf16.msra.mxu0 %v241
  %401 = vmatprep.subr.bf16.mxu0 0
  %402 = vmatpush1.bf16.msra.mxu0 0
  %403 = vmatprep.subr.bf16.mxu0 0
  %404 = vmatpush1.bf16.msra.mxu0 0
  %405 = vmatprep.subr.bf16.mxu0 0
  %406 = vmatpush1.bf16.msra.mxu0 0
  %407 = vmatprep.subr.bf16.mxu0 0
  %408 = vmatpush1.bf16.msra.mxu0 0
  %409 = vmatprep.subr.bf16.mxu0 0
  %410 = vmatpush1.bf16.msra.mxu0 0
  %411 = vmatprep.subr.bf16.mxu0 0
  %412 = vmatpush1.bf16.msra.mxu0 0
  %413 = vmatprep.subr.bf16.mxu0 0
  %414 = vmatpush1.bf16.msra.mxu0 0
  %415 = vmatprep.subr.bf16.mxu0 0
  %416 = vmatpush1.bf16.msra.mxu0 0
  %417 = vmatprep.mubr.bf16.mxu0 0
  %418 = vmatmul.mubr.bf16.gmra.mrb[0].mxu0 %v382
  %v419 = vpop.f32.mrb[0].mxu0
  %v420 = vadd.f32 %v384, %v419
  %v421 = vpop.f32.mrb[0].mxu0
  %v422 = vpop.f32.mrb[0].mxu0
  %v423 = vpop.f32.mrb[0].mxu0
  %424 = vdwg.mxu0
  %v425 = vtanh.pop %v420
  %426 = vst [vmem:[%s383] sm:$0xff] %v425
  %v427 = vpack.c.bf16 %v425, %v425
  %s428 = scalar_lea.vmem [#allocation2], 32
  %v429 = vld [vmem:[%s428] sm:$0xff]
  %430 = vmatprep.subr.bf16.mxu0 0
  %431 = vmatpush1.bf16.msra.mxu0 %v234
  %432 = vmatprep.subr.bf16.mxu0 0
  %433 = vmatpush1.bf16.msra.mxu0 %v235
  %434 = vmatprep.subr.bf16.mxu0 0
  %435 = vmatpush1.bf16.msra.mxu0 %v236
  %436 = vmatprep.subr.bf16.mxu0 0
  %437 = vmatpush1.bf16.msra.mxu0 %v237
  %438 = vmatprep.subr.bf16.mxu0 0
  %439 = vmatpush1.bf16.msra.mxu0 %v238
  %440 = vmatprep.subr.bf16.mxu0 0
  %441 = vmatpush1.bf16.msra.mxu0 %v239
  %442 = vmatprep.subr.bf16.mxu0 0
  %443 = vmatpush1.bf16.msra.mxu0 %v240
  %444 = vmatprep.subr.bf16.mxu0 0
  %445 = vmatpush1.bf16.msra.mxu0 %v241
  %446 = vmatprep.subr.bf16.mxu0 0
  %447 = vmatpush1.bf16.msra.mxu0 0
  %448 = vmatprep.subr.bf16.mxu0 0
  %449 = vmatpush1.bf16.msra.mxu0 0
  %450 = vmatprep.subr.bf16.mxu0 0
  %451 = vmatpush1.bf16.msra.mxu0 0
  %452 = vmatprep.subr.bf16.mxu0 0
  %453 = vmatpush1.bf16.msra.mxu0 0
  %454 = vmatprep.subr.bf16.mxu0 0
  %455 = vmatpush1.bf16.msra.mxu0 0
  %456 = vmatprep.subr.bf16.mxu0 0
  %457 = vmatpush1.bf16.msra.mxu0 0
  %458 = vmatprep.subr.bf16.mxu0 0
  %459 = vmatpush1.bf16.msra.mxu0 0
  %460 = vmatprep.subr.bf16.mxu0 0
  %461 = vmatpush1.bf16.msra.mxu0 0
  %462 = vmatprep.mubr.bf16.mxu0 0
  %463 = vmatmul.mubr.bf16.gmra.mrb[0].mxu0 %v427
  %v464 = vpop.f32.mrb[0].mxu0
  %v465 = vadd.f32 %v429, %v464
  %v466 = vpop.f32.mrb[0].mxu0
  %v467 = vpop.f32.mrb[0].mxu0
  %v468 = vpop.f32.mrb[0].mxu0
  %469 = vdwg.mxu0
  %v470 = vtanh.pop %v465
  %471 = vst [vmem:[%s428] sm:$0xff] %v470
  %v472 = vpack.c.bf16 %v470, %v470
  %s473 = scalar_lea.vmem [#allocation2], 40
  %v474 = vld [vmem:[%s473] sm:$0xff]
  %475 = vmatprep.subr.bf16.mxu0 0
  %476 = vmatpush1.bf16.msra.mxu0 %v234
  %477 = vmatprep.subr.bf16.mxu0 0
  %478 = vmatpush1.bf16.msra.mxu0 %v235
  %479 = vmatprep.subr.bf16.mxu0 0
  %480 = vmatpush1.bf16.msra.mxu0 %v236
  %481 = vmatprep.subr.bf16.mxu0 0
  %482 = vmatpush1.bf16.msra.mxu0 %v237
  %483 = vmatprep.subr.bf16.mxu0 0
  %484 = vmatpush1.bf16.msra.mxu0 %v238
  %485 = vmatprep.subr.bf16.mxu0 0
  %486 = vmatpush1.bf16.msra.mxu0 %v239
  %487 = vmatprep.subr.bf16.mxu0 0
  %488 = vmatpush1.bf16.msra.mxu0 %v240
  %489 = vmatprep.subr.bf16.mxu0 0
  %490 = vmatpush1.bf16.msra.mxu0 %v241
  %491 = vmatprep.subr.bf16.mxu0 0
  %492 = vmatpush1.bf16.msra.mxu0 0
  %493 = vmatprep.subr.bf16.mxu0 0
  %494 = vmatpush1.bf16.msra.mxu0 0
  %495 = vmatprep.subr.bf16.mxu0 0
  %496 = vmatpush1.bf16.msra.mxu0 0
  %497 = vmatprep.subr.bf16.mxu0 0
  %498 = vmatpush1.bf16.msra.mxu0 0
  %499 = vmatprep.subr.bf16.mxu0 0
  %500 = vmatpush1.bf16.msra.mxu0 0
  %501 = vmatprep.subr.bf16.mxu0 0
  %502 = vmatpush1.bf16.msra.mxu0 0
  %503 = vmatprep.subr.bf16.mxu0 0
  %504 = vmatpush1.bf16.msra.mxu0 0
  %505 = vmatprep.subr.bf16.mxu0 0
  %506 = vmatpush1.bf16.msra.mxu0 0
  %507 = vmatprep.mubr.bf16.mxu0 0
  %508 = vmatmul.mubr.bf16.gmra.mrb[0].mxu0 %v472
  %v509 = vpop.f32.mrb[0].mxu0
  %v510 = vadd.f32 %v474, %v509
  %v511 = vpop.f32.mrb[0].mxu0
  %v512 = vpop.f32.mrb[0].mxu0
  %v513 = vpop.f32.mrb[0].mxu0
  %514 = vdwg.mxu0
  %v515 = vtanh.pop %v510
  %516 = vst [vmem:[%s473] sm:$0xff] %v515
  %v517 = vpack.c.bf16 %v515, %v515
  %s518 = scalar_lea.vmem [#allocation2], 48
  %v519 = vld [vmem:[%s518] sm:$0xff]
  %520 = vmatprep.subr.bf16.mxu0 0
  %521 = vmatpush1.bf16.msra.mxu0 %v234
  %522 = vmatprep.subr.bf16.mxu0 0
  %523 = vmatpush1.bf16.msra.mxu0 %v235
  %524 = vmatprep.subr.bf16.mxu0 0
  %525 = vmatpush1.bf16.msra.mxu0 %v236
  %526 = vmatprep.subr.bf16.mxu0 0
  %527 = vmatpush1.bf16.msra.mxu0 %v237
  %528 = vmatprep.subr.bf16.mxu0 0
  %529 = vmatpush1.bf16.msra.mxu0 %v238
  %530 = vmatprep.subr.bf16.mxu0 0
  %531 = vmatpush1.bf16.msra.mxu0 %v239
  %532 = vmatprep.subr.bf16.mxu0 0
  %533 = vmatpush1.bf16.msra.mxu0 %v240
  %534 = vmatprep.subr.bf16.mxu0 0
  %535 = vmatpush1.bf16.msra.mxu0 %v241
  %536 = vmatprep.subr.bf16.mxu0 0
  %537 = vmatpush1.bf16.msra.mxu0 0
  %538 = vmatprep.subr.bf16.mxu0 0
  %539 = vmatpush1.bf16.msra.mxu0 0
  %540 = vmatprep.subr.bf16.mxu0 0
  %541 = vmatpush1.bf16.msra.mxu0 0
  %542 = vmatprep.subr.bf16.mxu0 0
  %543 = vmatpush1.bf16.msra.mxu0 0
  %544 = vmatprep.subr.bf16.mxu0 0
  %545 = vmatpush1.bf16.msra.mxu0 0
  %546 = vmatprep.subr.bf16.mxu0 0
  %547 = vmatpush1.bf16.msra.mxu0 0
  %548 = vmatprep.subr.bf16.mxu0 0
  %549 = vmatpush1.bf16.msra.mxu0 0
  %550 = vmatprep.subr.bf16.mxu0 0
  %551 = vmatpush1.bf16.msra.mxu0 0
  %552 = vmatprep.mubr.bf16.mxu0 0
  %553 = vmatmul.mubr.bf16.gmra.mrb[0].mxu0 %v517
  %v554 = vpop.f32.mrb[0].mxu0
  %v555 = vadd.f32 %v519, %v554
  %v556 = vpop.f32.mrb[0].mxu0
  %v557 = vpop.f32.mrb[0].mxu0
  %v558 = vpop.f32.mrb[0].mxu0
  %559 = vdwg.mxu0
  %v560 = vtanh.pop %v555
  %561 = vst [vmem:[%s518] sm:$0xff] %v560
  %v562 = vpack.c.bf16 %v560, %v560
  %s563 = scalar_lea.vmem [#allocation2], 56
  %v564 = vld [vmem:[%s563] sm:$0xff]
  %565 = vmatprep.subr.bf16.mxu0 0
  %566 = vmatpush1.bf16.msra.mxu0 %v234
  %567 = vmatprep.subr.bf16.mxu0 0
  %568 = vmatpush1.bf16.msra.mxu0 %v235
  %569 = vmatprep.subr.bf16.mxu0 0
  %570 = vmatpush1.bf16.msra.mxu0 %v236
  %571 = vmatprep.subr.bf16.mxu0 0
  %572 = vmatpush1.bf16.msra.mxu0 %v237
  %573 = vmatprep.subr.bf16.mxu0 0
  %574 = vmatpush1.bf16.msra.mxu0 %v238
  %575 = vmatprep.subr.bf16.mxu0 0
  %576 = vmatpush1.bf16.msra.mxu0 %v239
  %577 = vmatprep.subr.bf16.mxu0 0
  %578 = vmatpush1.bf16.msra.mxu0 %v240
  %579 = vmatprep.subr.bf16.mxu0 0
  %580 = vmatpush1.bf16.msra.mxu0 %v241
  %581 = vmatprep.subr.bf16.mxu0 0
  %582 = vmatpush1.bf16.msra.mxu0 0
  %583 = vmatprep.subr.bf16.mxu0 0
  %584 = vmatpush1.bf16.msra.mxu0 0
  %585 = vmatprep.subr.bf16.mxu0 0
  %586 = vmatpush1.bf16.msra.mxu0 0
  %587 = vmatprep.subr.bf16.mxu0 0
  %588 = vmatpush1.bf16.msra.mxu0 0
  %589 = vmatprep.subr.bf16.mxu0 0
  %590 = vmatpush1.bf16.msra.mxu0 0
  %591 = vmatprep.subr.bf16.mxu0 0
  %592 = vmatpush1.bf16.msra.mxu0 0
  %593 = vmatprep.subr.bf16.mxu0 0
  %594 = vmatpush1.bf16.msra.mxu0 0
  %595 = vmatprep.subr.bf16.mxu0 0
  %596 = vmatpush1.bf16.msra.mxu0 0
  %597 = vmatprep.mubr.bf16.mxu0 0
  %598 = vmatmul.mubr.bf16.gmra.mrb[0].mxu0 %v562
  %v599 = vpop.f32.mrb[0].mxu0
  %v600 = vadd.f32 %v564, %v599
  %v601 = vpop.f32.mrb[0].mxu0
  %v602 = vpop.f32.mrb[0].mxu0
  %v603 = vpop.f32.mrb[0].mxu0
  %604 = vdwg.mxu0
  %v605 = vtanh.pop %v600
  %606 = vst [vmem:[%s563] sm:$0xff] %v605
  %607 = vst [vmem:[%s8] sm:$0xff] %v605
  %v608 = vld [vmem:[#allocation2] sm:$0xff]
  %v609 = vld [vmem:[#allocation2 + $0x8] sm:$0xff]
  %v610 = vld [vmem:[#allocation2 + $0x10] sm:$0xff]
  %v611 = vld [vmem:[#allocation2 + $0x18] sm:$0xff]
  %v612 = vld [vmem:[#allocation2 + $0x20] sm:$0xff]
  %v613 = vld [vmem:[#allocation2 + $0x28] sm:$0xff]
  %v614 = vld [vmem:[#allocation2 + $0x30] sm:$0xff]
  %v615 = vld [vmem:[#allocation2 + $0x38] sm:$0xff]
  %v616 = vpack.c.bf16 %v609, %v608
  %v617 = vpack.c.bf16 %v611, %v610
  %v618 = vpack.c.bf16 %v613, %v612
  %v619 = vpack.c.bf16 %v615, %v614
  %v620 = vld [vmem:[%s2] sm:$0xf]
  %v621 = vld [vmem:[%s2 + $0x4] sm:$0xf]
  %v622 = vld [vmem:[%s2 + $0x8] sm:$0xf]
  %v623 = vld [vmem:[%s2 + $0xc] sm:$0xf]
  %v624 = vld [vmem:[%s2 + $0x10] sm:$0xf]
  %v625 = vld [vmem:[%s2 + $0x14] sm:$0xf]
  %v626 = vld [vmem:[%s2 + $0x18] sm:$0xf]
  %v627 = vld [vmem:[%s2 + $0x1c] sm:$0xf]
  %v628 = vld [vmem:[%s2 + $0x20] sm:$0xf]
  %v629 = vld [vmem:[%s2 + $0x24] sm:$0xf]
  %v630 = vld [vmem:[%s2 + $0x28] sm:$0xf]
  %v631 = vld [vmem:[%s2 + $0x2c] sm:$0xf]
  %v632 = vld [vmem:[%s2 + $0x30] sm:$0xf]
  %v633 = vld [vmem:[%s2 + $0x34] sm:$0xf]
  %v634 = vld [vmem:[%s2 + $0x38] sm:$0xf]
  %v635 = vld [vmem:[%s2 + $0x3c] sm:$0xf]
  %v636 = vld [vmem:[%s6] sm:$0x1]
  %v638 = vlaneseq
  %v639 = vshrl.u32 %v638, 7
  %v640 = vsub.s32 0, %v639
  %v641 = vrot.slane %v636, %v640
  %v659 = vunpack.c.l.b16 %v620
  %v660 = vunpack.c.l.b16 %v621
  %v661 = vunpack.c.l.b16 %v622
  %v662 = vunpack.c.l.b16 %v623
  %v663 = vunpack.c.l.b16 %v624
  %v664 = vunpack.c.l.b16 %v625
  %v665 = vunpack.c.l.b16 %v626
  %v666 = vunpack.c.l.b16 %v627
  %v667 = vunpack.c.l.b16 %v628
  %v668 = vunpack.c.l.b16 %v629
  %v669 = vunpack.c.l.b16 %v630
  %v670 = vunpack.c.l.b16 %v631
  %v671 = vunpack.c.l.b16 %v632
  %v672 = vunpack.c.l.b16 %v633
  %v673 = vunpack.c.l.b16 %v634
  %v674 = vunpack.c.l.b16 %v635
  %v675 = vpack.c.b16 %v660, %v659
  %v676 = vpack.c.b16 %v662, %v661
  %v677 = vpack.c.b16 %v664, %v663
  %v678 = vpack.c.b16 %v666, %v665
  %v679 = vpack.c.b16 %v668, %v667
  %v680 = vpack.c.b16 %v670, %v669
  %v681 = vpack.c.b16 %v672, %v671
  %v682 = vpack.c.b16 %v674, %v673
  %691 = vmatprep.subr.bf16.mxu0 0
  %692 = vmatpush1.bf16.msra.mxu0 %v675
  %693 = vmatprep.subr.bf16.mxu0 0
  %694 = vmatpush1.bf16.msra.mxu0 %v676
  %695 = vmatprep.subr.bf16.mxu0 0
  %696 = vmatpush1.bf16.msra.mxu0 %v677
  %697 = vmatprep.subr.bf16.mxu0 0
  %698 = vmatpush1.bf16.msra.mxu0 %v678
  %699 = vmatprep.subr.bf16.mxu0 0
  %700 = vmatpush1.bf16.msra.mxu0 %v679
  %701 = vmatprep.subr.bf16.mxu0 0
  %702 = vmatpush1.bf16.msra.mxu0 %v680
  %703 = vmatprep.subr.bf16.mxu0 0
  %704 = vmatpush1.bf16.msra.mxu0 %v681
  %705 = vmatprep.subr.bf16.mxu0 0
  %706 = vmatpush1.bf16.msra.mxu0 %v682
  %707 = vmatprep.subr.bf16.mxu0 0
  %708 = vmatpush1.bf16.msra.mxu0 0
  %709 = vmatprep.subr.bf16.mxu0 0
  %710 = vmatpush1.bf16.msra.mxu0 0
  %711 = vmatprep.subr.bf16.mxu0 0
  %712 = vmatpush1.bf16.msra.mxu0 0
  %713 = vmatprep.subr.bf16.mxu0 0
  %714 = vmatpush1.bf16.msra.mxu0 0
  %715 = vmatprep.subr.bf16.mxu0 0
  %716 = vmatpush1.bf16.msra.mxu0 0
  %717 = vmatprep.subr.bf16.mxu0 0
  %718 = vmatpush1.bf16.msra.mxu0 0
  %719 = vmatprep.subr.bf16.mxu0 0
  %720 = vmatpush1.bf16.msra.mxu0 0
  %721 = vmatprep.subr.bf16.mxu0 0
  %722 = vmatpush1.bf16.msra.mxu0 0
  %723 = vmatprep.mubr.bf16.mxu0 0
  %724 = vmatmul.mubr.bf16.gmra.mrb[0].mxu0 %v616
  %v725 = vpop.f32.mrb[0].mxu0
  %v726 = vadd.f32 %v641, %v725
  %v727 = vpop.f32.mrb[0].mxu0
  %v728 = vpop.f32.mrb[0].mxu0
  %v729 = vadd.f32 %v641, %v728
  %v730 = vpop.f32.mrb[0].mxu0
  %731 = vmatprep.mubr.bf16.mxu0 0
  %732 = vmatmul.mubr.bf16.gmra.mrb[0].mxu0 %v617
  %v733 = vpop.f32.mrb[0].mxu0
  %v734 = vadd.f32 %v641, %v733
  %v735 = vpop.f32.mrb[0].mxu0
  %v736 = vpop.f32.mrb[0].mxu0
  %v737 = vadd.f32 %v641, %v736
  %v738 = vpop.f32.mrb[0].mxu0
  %739 = vmatprep.mubr.bf16.mxu0 0
  %740 = vmatmul.mubr.bf16.gmra.mrb[0].mxu0 %v618
  %v741 = vpop.f32.mrb[0].mxu0
  %v742 = vadd.f32 %v641, %v741
  %v743 = vpop.f32.mrb[0].mxu0
  %v744 = vpop.f32.mrb[0].mxu0
  %v745 = vadd.f32 %v641, %v744
  %v746 = vpop.f32.mrb[0].mxu0
  %747 = vmatprep.mubr.bf16.mxu0 0
  %748 = vmatmul.mubr.bf16.gmra.mrb[0].mxu0 %v619
  %v749 = vpop.f32.mrb[0].mxu0
  %v750 = vadd.f32 %v641, %v749
  %v751 = vpop.f32.mrb[0].mxu0
  %v752 = vpop.f32.mrb[0].mxu0
  %v753 = vadd.f32 %v641, %v752
  %v754 = vpop.f32.mrb[0].mxu0
  %755 = vdwg.mxu0
  %756 = vst [vmem:[%s7] sm:$0xff] %v726
  %757 = vst [vmem:[%s7 + $0x8] sm:$0xff] %v729
  %758 = vst [vmem:[%s7 + $0x10] sm:$0xff] %v734
  %759 = vst [vmem:[%s7 + $0x18] sm:$0xff] %v737
  %760 = vst [vmem:[%s7 + $0x20] sm:$0xff] %v742
  %761 = vst [vmem:[%s7 + $0x28] sm:$0xff] %v745
  %762 = vst [vmem:[%s7 + $0x30] sm:$0xff] %v750
  %763 = vst [vmem:[%s7 + $0x38] sm:$0xff] %v753
  %v764 = vld [vmem:[%s4] sm:$0xf]
  %v765 = vld [vmem:[%s4 + $0x4] sm:$0xf]
  %v766 = vld [vmem:[%s4 + $0x8] sm:$0xf]
  %v767 = vld [vmem:[%s4 + $0xc] sm:$0xf]
  %v768 = vld [vmem:[%s4 + $0x10] sm:$0xf]
  %v769 = vld [vmem:[%s4 + $0x14] sm:$0xf]
  %v770 = vld [vmem:[%s4 + $0x18] sm:$0xf]
  %v771 = vld [vmem:[%s4 + $0x1c] sm:$0xf]
  %v772 = vld [vmem:[%s4 + $0x20] sm:$0xf]
  %v773 = vld [vmem:[%s4 + $0x24] sm:$0xf]
  %v774 = vld [vmem:[%s4 + $0x28] sm:$0xf]
  %v775 = vld [vmem:[%s4 + $0x2c] sm:$0xf]
  %v776 = vld [vmem:[%s4 + $0x30] sm:$0xf]
  %v777 = vld [vmem:[%s4 + $0x34] sm:$0xf]
  %v778 = vld [vmem:[%s4 + $0x38] sm:$0xf]
  %v779 = vld [vmem:[%s4 + $0x3c] sm:$0xf]
  %v780 = vld [vmem:[%s7] sm:$0xff]
  %v797 = vunpack.c.l.b16 %v764
  %v798 = vunpack.c.l.b16 %v765
  %v799 = vunpack.c.l.b16 %v766
  %v800 = vunpack.c.l.b16 %v767
  %v801 = vunpack.c.l.b16 %v768
  %v802 = vunpack.c.l.b16 %v769
  %v803 = vunpack.c.l.b16 %v770
  %v804 = vunpack.c.l.b16 %v771
  %v805 = vunpack.c.l.b16 %v772
  %v806 = vunpack.c.l.b16 %v773
  %v807 = vunpack.c.l.b16 %v774
  %v808 = vunpack.c.l.b16 %v775
  %v809 = vunpack.c.l.b16 %v776
  %v810 = vunpack.c.l.b16 %v777
  %v811 = vunpack.c.l.b16 %v778
  %v812 = vunpack.c.l.b16 %v779
  %v813 = vpack.c.b16 %v798, %v797
  %v814 = vpack.c.b16 %v800, %v799
  %v815 = vpack.c.b16 %v802, %v801
  %v816 = vpack.c.b16 %v804, %v803
  %v817 = vpack.c.b16 %v806, %v805
  %v818 = vpack.c.b16 %v808, %v807
  %v819 = vpack.c.b16 %v810, %v809
  %v820 = vpack.c.b16 %v812, %v811
  %829 = vmatprep.subr.bf16.mxu0 0
  %830 = vmatpush1.bf16.msra.mxu0 %v813
  %831 = vmatprep.subr.bf16.mxu0 0
  %832 = vmatpush1.bf16.msra.mxu0 %v814
  %833 = vmatprep.subr.bf16.mxu0 0
  %834 = vmatpush1.bf16.msra.mxu0 %v815
  %835 = vmatprep.subr.bf16.mxu0 0
  %836 = vmatpush1.bf16.msra.mxu0 %v816
  %837 = vmatprep.subr.bf16.mxu0 0
  %838 = vmatpush1.bf16.msra.mxu0 %v817
  %839 = vmatprep.subr.bf16.mxu0 0
  %840 = vmatpush1.bf16.msra.mxu0 %v818
  %841 = vmatprep.subr.bf16.mxu0 0
  %842 = vmatpush1.bf16.msra.mxu0 %v819
  %843 = vmatprep.subr.bf16.mxu0 0
  %844 = vmatpush1.bf16.msra.mxu0 %v820
  %845 = vmatprep.subr.bf16.mxu0 0
  %846 = vmatpush1.bf16.msra.mxu0 0
  %847 = vmatprep.subr.bf16.mxu0 0
  %848 = vmatpush1.bf16.msra.mxu0 0
  %849 = vmatprep.subr.bf16.mxu0 0
  %850 = vmatpush1.bf16.msra.mxu0 0
  %851 = vmatprep.subr.bf16.mxu0 0
  %852 = vmatpush1.bf16.msra.mxu0 0
  %853 = vmatprep.subr.bf16.mxu0 0
  %854 = vmatpush1.bf16.msra.mxu0 0
  %855 = vmatprep.subr.bf16.mxu0 0
  %856 = vmatpush1.bf16.msra.mxu0 0
  %857 = vmatprep.subr.bf16.mxu0 0
  %858 = vmatpush1.bf16.msra.mxu0 0
  %859 = vmatprep.subr.bf16.mxu0 0
  %860 = vmatpush1.bf16.msra.mxu0 0
  %861 = vmatprep.mubr.bf16.mxu0 0
  %862 = vmatmul.mubr.bf16.gmra.mrb[0].mxu0 0
  %v863 = vpop.f32.mrb[0].mxu0
  %v864 = vadd.f32 %v780, %v863
  %v865 = vpop.f32.mrb[0].mxu0
  %v866 = vpop.f32.mrb[0].mxu0
  %v867 = vpop.f32.mrb[0].mxu0
  %868 = vdwg.mxu0
  %v869 = vtanh.pop %v864
  %870 = vst [vmem:[%s7] sm:$0xff] %v869
  %v871 = vpack.c.bf16 %v869, %v869
  %s872 = scalar_lea.vmem %s7, 8
  %v873 = vld [vmem:[%s872] sm:$0xff]
  %874 = vmatprep.subr.bf16.mxu0 0
  %875 = vmatpush1.bf16.msra.mxu0 %v813
  %876 = vmatprep.subr.bf16.mxu0 0
  %877 = vmatpush1.bf16.msra.mxu0 %v814
  %878 = vmatprep.subr.bf16.mxu0 0
  %879 = vmatpush1.bf16.msra.mxu0 %v815
  %880 = vmatprep.subr.bf16.mxu0 0
  %881 = vmatpush1.bf16.msra.mxu0 %v816
  %882 = vmatprep.subr.bf16.mxu0 0
  %883 = vmatpush1.bf16.msra.mxu0 %v817
  %884 = vmatprep.subr.bf16.mxu0 0
  %885 = vmatpush1.bf16.msra.mxu0 %v818
  %886 = vmatprep.subr.bf16.mxu0 0
  %887 = vmatpush1.bf16.msra.mxu0 %v819
  %888 = vmatprep.subr.bf16.mxu0 0
  %889 = vmatpush1.bf16.msra.mxu0 %v820
  %890 = vmatprep.subr.bf16.mxu0 0
  %891 = vmatpush1.bf16.msra.mxu0 0
  %892 = vmatprep.subr.bf16.mxu0 0
  %893 = vmatpush1.bf16.msra.mxu0 0
  %894 = vmatprep.subr.bf16.mxu0 0
  %895 = vmatpush1.bf16.msra.mxu0 0
  %896 = vmatprep.subr.bf16.mxu0 0
  %897 = vmatpush1.bf16.msra.mxu0 0
  %898 = vmatprep.subr.bf16.mxu0 0
  %899 = vmatpush1.bf16.msra.mxu0 0
  %900 = vmatprep.subr.bf16.mxu0 0
  %901 = vmatpush1.bf16.msra.mxu0 0
  %902 = vmatprep.subr.bf16.mxu0 0
  %903 = vmatpush1.bf16.msra.mxu0 0
  %904 = vmatprep.subr.bf16.mxu0 0
  %905 = vmatpush1.bf16.msra.mxu0 0
  %906 = vmatprep.mubr.bf16.mxu0 0
  %907 = vmatmul.mubr.bf16.gmra.mrb[0].mxu0 %v871
  %v908 = vpop.f32.mrb[0].mxu0
  %v909 = vadd.f32 %v873, %v908
  %v910 = vpop.f32.mrb[0].mxu0
  %v911 = vpop.f32.mrb[0].mxu0
  %v912 = vpop.f32.mrb[0].mxu0
  %913 = vdwg.mxu0
  %v914 = vtanh.pop %v909
  %915 = vst [vmem:[%s872] sm:$0xff] %v914
  %v916 = vpack.c.bf16 %v914, %v914
  %s917 = scalar_lea.vmem %s7, 16
  %v918 = vld [vmem:[%s917] sm:$0xff]
  %919 = vmatprep.subr.bf16.mxu0 0
  %920 = vmatpush1.bf16.msra.mxu0 %v813
  %921 = vmatprep.subr.bf16.mxu0 0
  %922 = vmatpush1.bf16.msra.mxu0 %v814
  %923 = vmatprep.subr.bf16.mxu0 0
  %924 = vmatpush1.bf16.msra.mxu0 %v815
  %925 = vmatprep.subr.bf16.mxu0 0
  %926 = vmatpush1.bf16.msra.mxu0 %v816
  %927 = vmatprep.subr.bf16.mxu0 0
  %928 = vmatpush1.bf16.msra.mxu0 %v817
  %929 = vmatprep.subr.bf16.mxu0 0
  %930 = vmatpush1.bf16.msra.mxu0 %v818
  %931 = vmatprep.subr.bf16.mxu0 0
  %932 = vmatpush1.bf16.msra.mxu0 %v819
  %933 = vmatprep.subr.bf16.mxu0 0
  %934 = vmatpush1.bf16.msra.mxu0 %v820
  %935 = vmatprep.subr.bf16.mxu0 0
  %936 = vmatpush1.bf16.msra.mxu0 0
  %937 = vmatprep.subr.bf16.mxu0 0
  %938 = vmatpush1.bf16.msra.mxu0 0
  %939 = vmatprep.subr.bf16.mxu0 0
  %940 = vmatpush1.bf16.msra.mxu0 0
  %941 = vmatprep.subr.bf16.mxu0 0
  %942 = vmatpush1.bf16.msra.mxu0 0
  %943 = vmatprep.subr.bf16.mxu0 0
  %944 = vmatpush1.bf16.msra.mxu0 0
  %945 = vmatprep.subr.bf16.mxu0 0
  %946 = vmatpush1.bf16.msra.mxu0 0
  %947 = vmatprep.subr.bf16.mxu0 0
  %948 = vmatpush1.bf16.msra.mxu0 0
  %949 = vmatprep.subr.bf16.mxu0 0
  %950 = vmatpush1.bf16.msra.mxu0 0
  %951 = vmatprep.mubr.bf16.mxu0 0
  %952 = vmatmul.mubr.bf16.gmra.mrb[0].mxu0 %v916
  %v953 = vpop.f32.mrb[0].mxu0
  %v954 = vadd.f32 %v918, %v953
  %v955 = vpop.f32.mrb[0].mxu0
  %v956 = vpop.f32.mrb[0].mxu0
  %v957 = vpop.f32.mrb[0].mxu0
  %958 = vdwg.mxu0
  %v959 = vtanh.pop %v954
  %960 = vst [vmem:[%s917] sm:$0xff] %v959
  %v961 = vpack.c.bf16 %v959, %v959
  %s962 = scalar_lea.vmem %s7, 24
  %v963 = vld [vmem:[%s962] sm:$0xff]
  %964 = vmatprep.subr.bf16.mxu0 0
  %965 = vmatpush1.bf16.msra.mxu0 %v813
  %966 = vmatprep.subr.bf16.mxu0 0
  %967 = vmatpush1.bf16.msra.mxu0 %v814
  %968 = vmatprep.subr.bf16.mxu0 0
  %969 = vmatpush1.bf16.msra.mxu0 %v815
  %970 = vmatprep.subr.bf16.mxu0 0
  %971 = vmatpush1.bf16.msra.mxu0 %v816
  %972 = vmatprep.subr.bf16.mxu0 0
  %973 = vmatpush1.bf16.msra.mxu0 %v817
  %974 = vmatprep.subr.bf16.mxu0 0
  %975 = vmatpush1.bf16.msra.mxu0 %v818
  %976 = vmatprep.subr.bf16.mxu0 0
  %977 = vmatpush1.bf16.msra.mxu0 %v819
  %978 = vmatprep.subr.bf16.mxu0 0
  %979 = vmatpush1.bf16.msra.mxu0 %v820
  %980 = vmatprep.subr.bf16.mxu0 0
  %981 = vmatpush1.bf16.msra.mxu0 0
  %982 = vmatprep.subr.bf16.mxu0 0
  %983 = vmatpush1.bf16.msra.mxu0 0
  %984 = vmatprep.subr.bf16.mxu0 0
  %985 = vmatpush1.bf16.msra.mxu0 0
  %986 = vmatprep.subr.bf16.mxu0 0
  %987 = vmatpush1.bf16.msra.mxu0 0
  %988 = vmatprep.subr.bf16.mxu0 0
  %989 = vmatpush1.bf16.msra.mxu0 0
  %990 = vmatprep.subr.bf16.mxu0 0
  %991 = vmatpush1.bf16.msra.mxu0 0
  %992 = vmatprep.subr.bf16.mxu0 0
  %993 = vmatpush1.bf16.msra.mxu0 0
  %994 = vmatprep.subr.bf16.mxu0 0
  %995 = vmatpush1.bf16.msra.mxu0 0
  %996 = vmatprep.mubr.bf16.mxu0 0
  %997 = vmatmul.mubr.bf16.gmra.mrb[0].mxu0 %v961
  %v998 = vpop.f32.mrb[0].mxu0
  %v999 = vadd.f32 %v963, %v998
  %v1000 = vpop.f32.mrb[0].mxu0
  %v1001 = vpop.f32.mrb[0].mxu0
  %v1002 = vpop.f32.mrb[0].mxu0
  %1003 = vdwg.mxu0
  %v1004 = vtanh.pop %v999
  %1005 = vst [vmem:[%s962] sm:$0xff] %v1004
  %v1006 = vpack.c.bf16 %v1004, %v1004
  %s1007 = scalar_lea.vmem %s7, 32
  %v1008 = vld [vmem:[%s1007] sm:$0xff]
  %1009 = vmatprep.subr.bf16.mxu0 0
  %1010 = vmatpush1.bf16.msra.mxu0 %v813
  %1011 = vmatprep.subr.bf16.mxu0 0
  %1012 = vmatpush1.bf16.msra.mxu0 %v814
  %1013 = vmatprep.subr.bf16.mxu0 0
  %1014 = vmatpush1.bf16.msra.mxu0 %v815
  %1015 = vmatprep.subr.bf16.mxu0 0
  %1016 = vmatpush1.bf16.msra.mxu0 %v816
  %1017 = vmatprep.subr.bf16.mxu0 0
  %1018 = vmatpush1.bf16.msra.mxu0 %v817
  %1019 = vmatprep.subr.bf16.mxu0 0
  %1020 = vmatpush1.bf16.msra.mxu0 %v818
  %1021 = vmatprep.subr.bf16.mxu0 0
  %1022 = vmatpush1.bf16.msra.mxu0 %v819
  %1023 = vmatprep.subr.bf16.mxu0 0
  %1024 = vmatpush1.bf16.msra.mxu0 %v820
  %1025 = vmatprep.subr.bf16.mxu0 0
  %1026 = vmatpush1.bf16.msra.mxu0 0
  %1027 = vmatprep.subr.bf16.mxu0 0
  %1028 = vmatpush1.bf16.msra.mxu0 0
  %1029 = vmatprep.subr.bf16.mxu0 0
  %1030 = vmatpush1.bf16.msra.mxu0 0
  %1031 = vmatprep.subr.bf16.mxu0 0
  %1032 = vmatpush1.bf16.msra.mxu0 0
  %1033 = vmatprep.subr.bf16.mxu0 0
  %1034 = vmatpush1.bf16.msra.mxu0 0
  %1035 = vmatprep.subr.bf16.mxu0 0
  %1036 = vmatpush1.bf16.msra.mxu0 0
  %1037 = vmatprep.subr.bf16.mxu0 0
  %1038 = vmatpush1.bf16.msra.mxu0 0
  %1039 = vmatprep.subr.bf16.mxu0 0
  %1040 = vmatpush1.bf16.msra.mxu0 0
  %1041 = vmatprep.mubr.bf16.mxu0 0
  %1042 = vmatmul.mubr.bf16.gmra.mrb[0].mxu0 %v1006
  %v1043 = vpop.f32.mrb[0].mxu0
  %v1044 = vadd.f32 %v1008, %v1043
  %v1045 = vpop.f32.mrb[0].mxu0
  %v1046 = vpop.f32.mrb[0].mxu0
  %v1047 = vpop.f32.mrb[0].mxu0
  %1048 = vdwg.mxu0
  %v1049 = vtanh.pop %v1044
  %1050 = vst [vmem:[%s1007] sm:$0xff] %v1049
  %v1051 = vpack.c.bf16 %v1049, %v1049
  %s1052 = scalar_lea.vmem %s7, 40
  %v1053 = vld [vmem:[%s1052] sm:$0xff]
  %1054 = vmatprep.subr.bf16.mxu0 0
  %1055 = vmatpush1.bf16.msra.mxu0 %v813
  %1056 = vmatprep.subr.bf16.mxu0 0
  %1057 = vmatpush1.bf16.msra.mxu0 %v814
  %1058 = vmatprep.subr.bf16.mxu0 0
  %1059 = vmatpush1.bf16.msra.mxu0 %v815
  %1060 = vmatprep.subr.bf16.mxu0 0
  %1061 = vmatpush1.bf16.msra.mxu0 %v816
  %1062 = vmatprep.subr.bf16.mxu0 0
  %1063 = vmatpush1.bf16.msra.mxu0 %v817
  %1064 = vmatprep.subr.bf16.mxu0 0
  %1065 = vmatpush1.bf16.msra.mxu0 %v818
  %1066 = vmatprep.subr.bf16.mxu0 0
  %1067 = vmatpush1.bf16.msra.mxu0 %v819
  %1068 = vmatprep.subr.bf16.mxu0 0
  %1069 = vmatpush1.bf16.msra.mxu0 %v820
  %1070 = vmatprep.subr.bf16.mxu0 0
  %1071 = vmatpush1.bf16.msra.mxu0 0
  %1072 = vmatprep.subr.bf16.mxu0 0
  %1073 = vmatpush1.bf16.msra.mxu0 0
  %1074 = vmatprep.subr.bf16.mxu0 0
  %1075 = vmatpush1.bf16.msra.mxu0 0
  %1076 = vmatprep.subr.bf16.mxu0 0
  %1077 = vmatpush1.bf16.msra.mxu0 0
  %1078 = vmatprep.subr.bf16.mxu0 0
  %1079 = vmatpush1.bf16.msra.mxu0 0
  %1080 = vmatprep.subr.bf16.mxu0 0
  %1081 = vmatpush1.bf16.msra.mxu0 0
  %1082 = vmatprep.subr.bf16.mxu0 0
  %1083 = vmatpush1.bf16.msra.mxu0 0
  %1084 = vmatprep.subr.bf16.mxu0 0
  %1085 = vmatpush1.bf16.msra.mxu0 0
  %1086 = vmatprep.mubr.bf16.mxu0 0
  %1087 = vmatmul.mubr.bf16.gmra.mrb[0].mxu0 %v1051
  %v1088 = vpop.f32.mrb[0].mxu0
  %v1089 = vadd.f32 %v1053, %v1088
  %v1090 = vpop.f32.mrb[0].mxu0
  %v1091 = vpop.f32.mrb[0].mxu0
  %v1092 = vpop.f32.mrb[0].mxu0
  %1093 = vdwg.mxu0
  %v1094 = vtanh.pop %v1089
  %1095 = vst [vmem:[%s1052] sm:$0xff] %v1094
  %v1096 = vpack.c.bf16 %v1094, %v1094
  %s1097 = scalar_lea.vmem %s7, 48
  %v1098 = vld [vmem:[%s1097] sm:$0xff]
  %1099 = vmatprep.subr.bf16.mxu0 0
  %1100 = vmatpush1.bf16.msra.mxu0 %v813
  %1101 = vmatprep.subr.bf16.mxu0 0
  %1102 = vmatpush1.bf16.msra.mxu0 %v814
  %1103 = vmatprep.subr.bf16.mxu0 0
  %1104 = vmatpush1.bf16.msra.mxu0 %v815
  %1105 = vmatprep.subr.bf16.mxu0 0
  %1106 = vmatpush1.bf16.msra.mxu0 %v816
  %1107 = vmatprep.subr.bf16.mxu0 0
  %1108 = vmatpush1.bf16.msra.mxu0 %v817
  %1109 = vmatprep.subr.bf16.mxu0 0
  %1110 = vmatpush1.bf16.msra.mxu0 %v818
  %1111 = vmatprep.subr.bf16.mxu0 0
  %1112 = vmatpush1.bf16.msra.mxu0 %v819
  %1113 = vmatprep.subr.bf16.mxu0 0
  %1114 = vmatpush1.bf16.msra.mxu0 %v820
  %1115 = vmatprep.subr.bf16.mxu0 0
  %1116 = vmatpush1.bf16.msra.mxu0 0
  %1117 = vmatprep.subr.bf16.mxu0 0
  %1118 = vmatpush1.bf16.msra.mxu0 0
  %1119 = vmatprep.subr.bf16.mxu0 0
  %1120 = vmatpush1.bf16.msra.mxu0 0
  %1121 = vmatprep.subr.bf16.mxu0 0
  %1122 = vmatpush1.bf16.msra.mxu0 0
  %1123 = vmatprep.subr.bf16.mxu0 0
  %1124 = vmatpush1.bf16.msra.mxu0 0
  %1125 = vmatprep.subr.bf16.mxu0 0
  %1126 = vmatpush1.bf16.msra.mxu0 0
  %1127 = vmatprep.subr.bf16.mxu0 0
  %1128 = vmatpush1.bf16.msra.mxu0 0
  %1129 = vmatprep.subr.bf16.mxu0 0
  %1130 = vmatpush1.bf16.msra.mxu0 0
  %1131 = vmatprep.mubr.bf16.mxu0 0
  %1132 = vmatmul.mubr.bf16.gmra.mrb[0].mxu0 %v1096
  %v1133 = vpop.f32.mrb[0].mxu0
  %v1134 = vadd.f32 %v1098, %v1133
  %v1135 = vpop.f32.mrb[0].mxu0
  %v1136 = vpop.f32.mrb[0].mxu0
  %v1137 = vpop.f32.mrb[0].mxu0
  %1138 = vdwg.mxu0
  %v1139 = vtanh.pop %v1134
  %1140 = vst [vmem:[%s1097] sm:$0xff] %v1139
  %v1141 = vpack.c.bf16 %v1139, %v1139
  %s1142 = scalar_lea.vmem %s7, 56
  %v1143 = vld [vmem:[%s1142] sm:$0xff]
  %1144 = vmatprep.subr.bf16.mxu0 0
  %1145 = vmatpush1.bf16.msra.mxu0 %v813
  %1146 = vmatprep.subr.bf16.mxu0 0
  %1147 = vmatpush1.bf16.msra.mxu0 %v814
  %1148 = vmatprep.subr.bf16.mxu0 0
  %1149 = vmatpush1.bf16.msra.mxu0 %v815
  %1150 = vmatprep.subr.bf16.mxu0 0
  %1151 = vmatpush1.bf16.msra.mxu0 %v816
  %1152 = vmatprep.subr.bf16.mxu0 0
  %1153 = vmatpush1.bf16.msra.mxu0 %v817
  %1154 = vmatprep.subr.bf16.mxu0 0
  %1155 = vmatpush1.bf16.msra.mxu0 %v818
  %1156 = vmatprep.subr.bf16.mxu0 0
  %1157 = vmatpush1.bf16.msra.mxu0 %v819
  %1158 = vmatprep.subr.bf16.mxu0 0
  %1159 = vmatpush1.bf16.msra.mxu0 %v820
  %1160 = vmatprep.subr.bf16.mxu0 0
  %1161 = vmatpush1.bf16.msra.mxu0 0
  %1162 = vmatprep.subr.bf16.mxu0 0
  %1163 = vmatpush1.bf16.msra.mxu0 0
  %1164 = vmatprep.subr.bf16.mxu0 0
  %1165 = vmatpush1.bf16.msra.mxu0 0
  %1166 = vmatprep.subr.bf16.mxu0 0
  %1167 = vmatpush1.bf16.msra.mxu0 0
  %1168 = vmatprep.subr.bf16.mxu0 0
  %1169 = vmatpush1.bf16.msra.mxu0 0
  %1170 = vmatprep.subr.bf16.mxu0 0
  %1171 = vmatpush1.bf16.msra.mxu0 0
  %1172 = vmatprep.subr.bf16.mxu0 0
  %1173 = vmatpush1.bf16.msra.mxu0 0
  %1174 = vmatprep.subr.bf16.mxu0 0
  %1175 = vmatpush1.bf16.msra.mxu0 0
  %1176 = vmatprep.mubr.bf16.mxu0 0
  %1177 = vmatmul.mubr.bf16.gmra.mrb[0].mxu0 %v1141
  %v1178 = vpop.f32.mrb[0].mxu0
  %v1179 = vadd.f32 %v1143, %v1178
  %v1180 = vpop.f32.mrb[0].mxu0
  %v1181 = vpop.f32.mrb[0].mxu0
  %v1182 = vpop.f32.mrb[0].mxu0
  %1183 = vdwg.mxu0
  %v1184 = vtanh.pop %v1179
  %1185 = vst [vmem:[%s1142] sm:$0xff] %v1184
  %s1186 = scalar_lea.vmem %s8, 8
  %1187 = vst [vmem:[%s1186] sm:$0xff] %v1184
  // Predicated region
  $region30: #{rnnlm_forward.2} parent=0 // pred_check
    _
  $region31: #{rnnlm_forward.2} parent=0 // pred_check_branch
    %1189 = sbr.rel (0) target = $region33
  $region32: #{rnnlm_forward.2} parent=0 // pred_region
    _
  $region33: #{rnnlm_forward.2} parent=0 // pred_fallthru
    _
  // Predicated region
  $region34: #{rnnlm_forward.2} parent=0 // pred_check
    _
  $region35: #{rnnlm_forward.2} parent=0 // pred_check_branch
    %1191 = sbr.rel (0) target = $region37
  $region36: #{rnnlm_forward.2} parent=0 // pred_region
    _
  $region37: #{rnnlm_forward.2} parent=0 // pred_fallthru
    _
  // Predicated region
  $region38: #{rnnlm_forward.2} parent=0 // pred_check
    _
  $region39: #{rnnlm_forward.2} parent=0 // pred_check_branch
    %1193 = sbr.rel (0) target = $region41
  $region40: #{rnnlm_forward.2} parent=0 // pred_region
    _
  $region41: #{rnnlm_forward.2} parent=0 // pred_fallthru
    _
  // Predicated region
  $region42: #{rnnlm_forward.2} parent=0 // pred_check
    _
  $region43: #{rnnlm_forward.2} parent=0 // pred_check_branch
    %1195 = sbr.rel (0) target = $region45
  $region44: #{rnnlm_forward.2} parent=0 // pred_region
    _
  $region45: #{rnnlm_forward.2} parent=0 // pred_fallthru
    _

</llo_original>
